<compile_context>
chip_gen: v5e
topology: v5e:2x2
jax: 0.10.0
libtpu: 0.0.40
codegen_flags: <defaults>
</compile_context>

<pallas_src>
import functools

import jax
import jax.numpy as jnp
import numpy as np
from jax.experimental import pallas as pl
from jax.experimental.pallas import tpu as pltpu

EXPANSION = 4
BN_EPS = 1e-5
LANE = 128


def _round_up(x, m):
    return (x + m - 1) // m * m


def bottleneck_kernel(*refs, stride, has_proj, hw):
    """One batch element per grid step; channel dims pre-padded to LANE multiples.

    x_ref : (1, H*W, CinP)     rows ordered (pr, pc, r, c)  [space-to-depth]
    w1    : (CinP, CmidP)          1x1 conv
    w2    : (9, CmidP, CmidP)      3x3 conv taps, t = ky*3 + kx
    w3    : (CmidP, CoutP)         1x1 conv
    wsc   : (CinP, CoutP)          shortcut 1x1 conv (only when has_proj)
    s*/b* : (1, C)                 folded BatchNorm scale / shift (f32)
    o_ref : (1, Ho*Wo, CoutP)
    pad_ref: (s, s, Hh, Wh, CmidP) parity-plane zero-padded conv2 input (f32)
             pad_ref[pr, pc, r, c] == padded_y1[s*r + pr, s*c + pc]  (pad = 1)
    """
    if has_proj:
        (x_ref, w1_ref, s1_ref, b1_ref, w2_ref, s2_ref, b2_ref,
         w3_ref, s3_ref, b3_ref, wsc_ref, ssc_ref, bsc_ref,
         o_ref, pad_ref) = refs
    else:
        (x_ref, w1_ref, s1_ref, b1_ref, w2_ref, s2_ref, b2_ref,
         w3_ref, s3_ref, b3_ref, o_ref, pad_ref) = refs

    H, W = hw
    s = stride
    Ho, Wo = H // s, W // s
    R = Ho * Wo
    CinP = x_ref.shape[-1]
    CmidP = w1_ref.shape[1]
    _, _, Hh, Wh, _ = pad_ref.shape
    dot_dtype = w1_ref.dtype            # f32, or bf16 if the wrapper cast weights

    # ---- conv 1x1 + BN + ReLU (all s*s parity planes in one matmul) ----------
    x2d = x_ref[...].reshape(H * W, CinP)                    # f32 activations
    y1 = jnp.dot(x2d.astype(dot_dtype), w1_ref[...],
                 preferred_element_type=jnp.float32)
    y1 = jnp.maximum(y1 * s1_ref[...] + b1_ref[...], 0.0)    # (s*s*R, CmidP) f32

    # ---- zero the 1-wide padding border.  Done EVERY step (cheap): scratch is
    # per-core under megacore "parallel" partitioning, so a program_id==0 gate
    # would leave the other core's border uninitialized. ------------------------
    zrow = jnp.zeros((1, s, 1, Wh, CmidP), jnp.float32)
    zcol = jnp.zeros((s, 1, Hh, 1, CmidP), jnp.float32)
    pr_hi, r_hi = (H + 1) % s, (H + 1) // s
    pc_hi, c_hi = (W + 1) % s, (W + 1) // s
    pad_ref[0:1, :, 0:1, :, :] = zrow                         # padded row 0
    pad_ref[pr_hi:pr_hi + 1, :, r_hi:r_hi + 1, :, :] = zrow   # padded row H+1
    pad_ref[:, 0:1, :, 0:1, :] = zcol                         # padded col 0
    pad_ref[:, pc_hi:pc_hi + 1, :, c_hi:c_hi + 1, :] = zcol   # padded col W+1

    # ---- scatter conv1 output into the parity-plane padded scratch -----------
    for pr in range(s):
        for pc in range(s):
            p = pr * s + pc
            plane = y1[p * R:(p + 1) * R, :].reshape(Ho, Wo, CmidP)
            tpr, tpc = (pr + 1) % s, (pc + 1) % s
            orr, occ = (pr + 1) // s, (pc + 1) // s
            pad_ref[tpr:tpr + 1, tpc:tpc + 1,
                    orr:orr + Ho, occ:occ + Wo, :] = plane[None, None]

    # ---- conv 3x3 (stride, pad=1): 9 per-tap matmuls, f32 accumulation -------
    # Each tap window is a contiguous static slice of one parity plane, so there
    # are no strided reads, no masked column scatters, and no im2col buffer.
    y2 = None
    for ky in range(3):
        for kx in range(3):
            win = pad_ref[ky % s:ky % s + 1, kx % s:kx % s + 1,
                          ky // s:ky // s + Ho, kx // s:kx // s + Wo, :]
            win2d = win.reshape(R, CmidP)
            part = jnp.dot(win2d.astype(dot_dtype), w2_ref[ky * 3 + kx],
                           preferred_element_type=jnp.float32)
            y2 = part if y2 is None else y2 + part
    y2 = jnp.maximum(y2 * s2_ref[...] + b2_ref[...], 0.0)     # (R, CmidP)

    # ---- conv 1x1 + BN (already at output resolution) -------------------------
    y3 = jnp.dot(y2.astype(dot_dtype), w3_ref[...],
                 preferred_element_type=jnp.float32)
    y3 = y3 * s3_ref[...] + b3_ref[...]                        # (R, CoutP)

    # ---- shortcut: parity plane (0,0) of x IS the stride-subsampled input -----
    x_sc = x2d[0:R, :]
    if has_proj:
        ysc = jnp.dot(x_sc.astype(dot_dtype), wsc_ref[...],
                      preferred_element_type=jnp.float32)
        ysc = ysc * ssc_ref[...] + bsc_ref[...]                # (R, CoutP)
    else:
        ysc = x_sc                                             # identity shortcut

    o_ref[...] = jnp.maximum(y3 + ysc, 0.0)[None].astype(o_ref.dtype)


def _rep_spec(shape):
    """Full-array BlockSpec replicated across the batch grid axis."""
    def index_map(n):
        return (0,) * len(shape)
    return pl.BlockSpec(tuple(shape), index_map)


def _prepare_params(params, CinP, CmidP, CoutP, dot_dtype):
    """Zero-pad channel dims to lane multiples; cast weights to the matmul dtype.
    BN scale/shift stay f32 (padded channels compute to exactly 0)."""
    Cmid = params["w1"].shape[1]

    def pad_w(a, rows, cols):
        return jnp.pad(a, ((0, rows - a.shape[0]),
                           (0, cols - a.shape[1]))).astype(dot_dtype)

    def pad_bn(a, cols):
        return jnp.pad(a, ((0, 0), (0, cols - a.shape[1]))).astype(jnp.float32)

    w2 = params["w2"].reshape(9, Cmid, Cmid)
    w2 = jnp.pad(w2, ((0, 0), (0, CmidP - Cmid),
                      (0, CmidP - Cmid))).astype(dot_dtype)
    pp = dict(w1=pad_w(params["w1"], CinP, CmidP),
              s1=pad_bn(params["s1"], CmidP), b1=pad_bn(params["b1"], CmidP),
              w2=w2,
              s2=pad_bn(params["s2"], CmidP), b2=pad_bn(params["b2"], CmidP),
              w3=pad_w(params["w3"], CmidP, CoutP),
              s3=pad_bn(params["s3"], CoutP), b3=pad_bn(params["b3"], CoutP))
    if "wsc" in params:
        pp["wsc"] = pad_w(params["wsc"], CinP, CoutP)
        pp["ssc"] = pad_bn(params["ssc"], CoutP)
        pp["bsc"] = pad_bn(params["bsc"], CoutP)
    return pp


def _pallas_bottleneck(x_s2d, pp, *, stride, has_proj, H, W, out_dtype):
    N, HW, CinP = x_s2d.shape
    CmidP = pp["w1"].shape[1]
    CoutP = pp["w3"].shape[1]
    Ho, Wo = H // stride, W // stride
    R = Ho * Wo
    Hh = (H + 1) // stride + 1
    Wh = (W + 1) // stride + 1

    inputs = [x_s2d, pp["w1"], pp["s1"], pp["b1"], pp["w2"], pp["s2"], pp["b2"],
              pp["w3"], pp["s3"], pp["b3"]]
    if has_proj:
        inputs += [pp["wsc"], pp["ssc"], pp["bsc"]]

    in_specs = [pl.BlockSpec((1, HW, CinP), lambda n: (n, 0, 0))]
    in_specs += [_rep_spec(a.shape) for a in inputs[1:]]

    # VMEM budget derived from actual per-step usage (double-buffered I/O +
    # scratch + headroom), clamped to the v7x 64 MiB per-core ceiling.
    blk_bytes = HW * CinP * x_s2d.dtype.itemsize
    blk_bytes += sum(int(np.prod(a.shape)) * a.dtype.itemsize for a in inputs[1:])
    blk_bytes += R * CoutP * jnp.dtype(out_dtype).itemsize
    scratch_bytes = stride * stride * Hh * Wh * CmidP * 4
    vmem_limit = int(min(max(2 * blk_bytes + scratch_bytes + (4 << 20), 8 << 20),
                         64 << 20))

    kernel = functools.partial(bottleneck_kernel, stride=stride,
                               has_proj=has_proj, hw=(H, W))

    # TODO(synk): for large spatial extents (e.g. 56x56 ResNet stage-1 tensors on
    # v7x's 64 MiB VMEM) add a second "parallel" grid axis over output-row tiles.
    return pl.pallas_call(
        kernel,
        out_shape=jax.ShapeDtypeStruct((N, R, CoutP), out_dtype),
        grid_spec=pltpu.PrefetchScalarGridSpec(
            num_scalar_prefetch=0,
            grid=(N,),
            in_specs=in_specs,
            out_specs=pl.BlockSpec((1, R, CoutP), lambda n: (n, 0, 0)),
            scratch_shapes=[pltpu.VMEM((stride, stride, Hh, Wh, CmidP),
                                       jnp.float32)],
        ),
        compiler_params=pltpu.CompilerParams(
            dimension_semantics=("parallel",),      # batch sharded over TCs
            vmem_limit_bytes=vmem_limit),
    )(*inputs)                                      # (N, Ho*Wo, CoutP)


def bottleneck_forward_nhwc(x_nhwc, params, stride, *, use_bf16_matmul=True):
    """NHWC in / NHWC out.  Preferred entry point: chaining bottleneck blocks in
    NHWC avoids per-block NCHW<->NHWC round-trips through HBM."""
    N, H, W, Cin = x_nhwc.shape
    Cmid = params["w1"].shape[1]
    Cout = params["w3"].shape[1]
    assert H % stride == 0 and W % stride == 0
    has_proj = "wsc" in params
    if not has_proj:
        assert stride == 1 and Cin == Cout

    CinP, CmidP, CoutP = (_round_up(c, LANE) for c in (Cin, Cmid, Cout))
    Ho, Wo = H // stride, W // stride
    dot_dtype = jnp.bfloat16 if use_bf16_matmul else jnp.float32

    # Space-to-depth (rows ordered (pr, pc, r, c)) so every strided 3x3 window
    # and the strided shortcut read become contiguous static slices in-kernel,
    # plus lane-padding of channels so all kernel stores/loads are lane-dense.
    x6 = x_nhwc.reshape(N, Ho, stride, Wo, stride, Cin)
    x6 = jnp.transpose(x6, (0, 2, 4, 1, 3, 5))                # (N, s, s, Ho, Wo, C)
    x2 = x6.reshape(N, H * W, Cin)
    x2 = jnp.pad(x2, ((0, 0), (0, 0), (0, CinP - Cin)))

    pp = _prepare_params(params, CinP, CmidP, CoutP, dot_dtype)
    out = _pallas_bottleneck(x2, pp, stride=stride, has_proj=has_proj,
                             H=H, W=W, out_dtype=x_nhwc.dtype)
    return out.reshape(N, Ho, Wo, CoutP)[..., :Cout]


def bottleneck_forward(x_nchw, params, stride, *, use_bf16_matmul=True):
    """PyTorch layout: (N, Cin, H, W) f32 -> (N, Cout*4, H//stride, W//stride)."""
    x_nhwc = jnp.transpose(x_nchw, (0, 2, 3, 1))
    out = bottleneck_forward_nhwc(x_nhwc, params, stride,
                                  use_bf16_matmul=use_bf16_matmul)
    return jnp.transpose(out, (0, 3, 1, 2))


def make_params(key, in_channels, out_channels, stride):
    """Deterministic synthetic parameters matching BottleNeck.__init__ shapes."""
    exp_c = out_channels * EXPANSION
    k1, k2, k3, k4 = jax.random.split(key, 4)

    w1 = 0.1 * jax.random.normal(k1, (in_channels, out_channels), jnp.float32)
    w2 = 0.1 * jax.random.normal(k2, (3, 3, out_channels, out_channels), jnp.float32)
    w3 = 0.1 * jax.random.normal(k3, (out_channels, exp_c), jnp.float32)

    def bn(c, salt):
        idx = jnp.arange(c, dtype=jnp.float32)
        gamma = 1.0 + 0.01 * idx + salt
        beta = 0.02 * idx - salt
        mean = 0.03 * idx
        var = 1.0 + 0.05 * idx
        scale = gamma * jax.lax.rsqrt(var + BN_EPS)
        shift = beta - mean * scale
        return scale.reshape(1, c), shift.reshape(1, c)

    s1, b1 = bn(out_channels, 0.10)
    s2, b2 = bn(out_channels, 0.20)
    s3, b3 = bn(exp_c, 0.30)
    params = dict(w1=w1, s1=s1, b1=b1, w2=w2, s2=s2, b2=b2, w3=w3, s3=s3, b3=b3)

    if stride != 1 or in_channels != exp_c:        # projection shortcut
        wsc = 0.1 * jax.random.normal(k4, (in_channels, exp_c), jnp.float32)
        ssc, bsc = bn(exp_c, 0.40)
        params.update(wsc=wsc, ssc=ssc, bsc=bsc)
    return params


def reference_forward(x_nchw, params, stride):
    """Pure-JAX reference (lax.conv) for correctness checking."""
    x = jnp.transpose(x_nchw, (0, 2, 3, 1)).astype(jnp.float32)

    def conv(v, w, s, padding):
        return jax.lax.conv_general_dilated(
            v, w, (s, s), padding,
            dimension_numbers=("NHWC", "HWIO", "NHWC"),
            precision=jax.lax.Precision.HIGHEST)

    y = conv(x, params["w1"][None, None], 1, "VALID")
    y = jnp.maximum(y * params["s1"][0] + params["b1"][0], 0.0)
    y = conv(y, params["w2"], stride, [(1, 1), (1, 1)])
    y = jnp.maximum(y * params["s2"][0] + params["b2"][0], 0.0)
    y = conv(y, params["w3"][None, None], 1, "VALID")
    y = y * params["s3"][0] + params["b3"][0]

    if "wsc" in params:
        sc = conv(x, params["wsc"][None, None], stride, "VALID")
        sc = sc * params["ssc"][0] + params["bsc"][0]
    else:
        sc = x

    out = jnp.maximum(y + sc, 0.0)
    return jnp.transpose(out, (0, 3, 1, 2))


if __name__ == "__main__":
    key = jax.random.PRNGKey(0)

    configs = [
        # (N, in_c, out_c, H, W, stride)
        (2, 8, 8, 16, 16, 2),     # projection shortcut + stride-2
        (2, 32, 8, 16, 16, 1),    # identity shortcut (in_c == out_c*4, stride 1)
    ]

    for (N, in_c, out_c, H, W, stride) in configs:
        kx, kp, key = jax.random.split(key, 3)
        x = jax.random.normal(kx, (N, in_c, H, W), jnp.float32)   # NCHW, like PyTorch
        params = make_params(kp, in_c, out_c, stride)

        ref = jax.block_until_ready(reference_forward(x, params, stride))

        # exact-precision path (f32 matmuls) -- tight tolerance
        out = jax.block_until_ready(
            bottleneck_forward(x, params, stride, use_bf16_matmul=False))
        assert out.shape == (N, out_c * EXPANSION, H // stride, W // stride), out.shape
        np.testing.assert_allclose(np.asarray(out), np.asarray(ref),
                                   atol=2e-3, rtol=2e-3)

        # default fast path (bf16 weights/activations into the MXU, f32 accum)
        out_bf16 = jax.block_until_ready(
            bottleneck_forward(x, params, stride, use_bf16_matmul=True))
        np.testing.assert_allclose(np.asarray(out_bf16), np.asarray(ref),
                                   atol=1e-1, rtol=1e-1)

    print("KERNEL_OK")
</pallas_src>

<mosaic_0001>
module attributes {stable_mosaic.version = 11 : i64} {
  func.func @bottleneck_kernel(%arg0: i32, %arg1: memref<1x256x128xf32, #tpu.memory_space<vmem>>, %arg2: memref<128x128xf32, #tpu.memory_space<vmem>>, %arg3: memref<1x128xf32, #tpu.memory_space<vmem>>, %arg4: memref<1x128xf32, #tpu.memory_space<vmem>>, %arg5: memref<9x128x128xf32, #tpu.memory_space<vmem>>, %arg6: memref<1x128xf32, #tpu.memory_space<vmem>>, %arg7: memref<1x128xf32, #tpu.memory_space<vmem>>, %arg8: memref<128x128xf32, #tpu.memory_space<vmem>>, %arg9: memref<1x128xf32, #tpu.memory_space<vmem>>, %arg10: memref<1x128xf32, #tpu.memory_space<vmem>>, %arg11: memref<128x128xf32, #tpu.memory_space<vmem>>, %arg12: memref<1x128xf32, #tpu.memory_space<vmem>>, %arg13: memref<1x128xf32, #tpu.memory_space<vmem>>, %arg14: memref<1x64x128xf32, #tpu.memory_space<vmem>>, %arg15: memref<2x2x9x9x128xf32, #tpu.memory_space<vmem>>) attributes {dimension_semantics = [#tpu.dimension_semantics<parallel>], iteration_bounds = array<i64: 2>, scalar_prefetch = 0 : i64, scratch_operands = 1 : i64, tpu.core_type = #tpu.core_type<tc>, window_params = [{transform_indices = @transform_0, window_bounds = array<i64: 1, 256, 128>}, {pipeline_mode = #tpu.pipeline_mode<synchronous>, transform_indices = @transform_1, window_bounds = array<i64: 128, 128>}, {pipeline_mode = #tpu.pipeline_mode<synchronous>, transform_indices = @transform_2, window_bounds = array<i64: 1, 128>}, {pipeline_mode = #tpu.pipeline_mode<synchronous>, transform_indices = @transform_3, window_bounds = array<i64: 1, 128>}, {pipeline_mode = #tpu.pipeline_mode<synchronous>, transform_indices = @transform_4, window_bounds = array<i64: 9, 128, 128>}, {pipeline_mode = #tpu.pipeline_mode<synchronous>, transform_indices = @transform_5, window_bounds = array<i64: 1, 128>}, {pipeline_mode = #tpu.pipeline_mode<synchronous>, transform_indices = @transform_6, window_bounds = array<i64: 1, 128>}, {pipeline_mode = #tpu.pipeline_mode<synchronous>, transform_indices = @transform_7, window_bounds = array<i64: 128, 128>}, {pipeline_mode = #tpu.pipeline_mode<synchronous>, transform_indices = @transform_8, window_bounds = array<i64: 1, 128>}, {pipeline_mode = #tpu.pipeline_mode<synchronous>, transform_indices = @transform_9, window_bounds = array<i64: 1, 128>}, {pipeline_mode = #tpu.pipeline_mode<synchronous>, transform_indices = @transform_10, window_bounds = array<i64: 128, 128>}, {pipeline_mode = #tpu.pipeline_mode<synchronous>, transform_indices = @transform_11, window_bounds = array<i64: 1, 128>}, {pipeline_mode = #tpu.pipeline_mode<synchronous>, transform_indices = @transform_12, window_bounds = array<i64: 1, 128>}, {transform_indices = @transform_13, window_bounds = array<i64: 1, 64, 128>}]} {
    %c0 = arith.constant 0 : index
    %c0_0 = arith.constant 0 : index
    %c0_1 = arith.constant 0 : index
    %0 = vector.load %arg1[%c0, %c0_0, %c0_1] : memref<1x256x128xf32, #tpu.memory_space<vmem>>, vector<1x256x128xf32>
    %1 = vector.shape_cast %0 : vector<1x256x128xf32> to vector<256x128xf32>
    %c0_2 = arith.constant 0 : index
    %c0_3 = arith.constant 0 : index
    %2 = vector.load %arg2[%c0_2, %c0_3] : memref<128x128xf32, #tpu.memory_space<vmem>>, vector<128x128xf32>
    %cst = arith.constant dense<0.000000e+00> : vector<256x128xf32>
    %3 = tpu.matmul %1, %2, %cst {dimension_numbers = #tpu.dot_dimension_numbers<[1], [0], [0], [1], [0, 0, 1, 1], [], []>} : vector<256x128xf32>, vector<128x128xf32>, vector<256x128xf32> -> vector<256x128xf32>
    %c0_4 = arith.constant 0 : index
    %c0_5 = arith.constant 0 : index
    %4 = vector.load %arg3[%c0_4, %c0_5] : memref<1x128xf32, #tpu.memory_space<vmem>>, vector<1x128xf32>
    %5 = vector.broadcast %4 : vector<1x128xf32> to vector<256x128xf32>
    %6 = arith.mulf %3, %5 : vector<256x128xf32>
    %c0_6 = arith.constant 0 : index
    %c0_7 = arith.constant 0 : index
    %7 = vector.load %arg4[%c0_6, %c0_7] : memref<1x128xf32, #tpu.memory_space<vmem>>, vector<1x128xf32>
    %8 = vector.broadcast %7 : vector<1x128xf32> to vector<256x128xf32>
    %9 = arith.addf %6, %8 : vector<256x128xf32>
    %cst_8 = arith.constant 0.000000e+00 : f32
    %10 = vector.broadcast %cst_8 : f32 to vector<256x128xf32>
    %11 = arith.maximumf %9, %10 : vector<256x128xf32>
    %cst_9 = arith.constant 0.000000e+00 : f32
    %12 = vector.broadcast %cst_9 : f32 to vector<1x2x1x9x128xf32>
    %cst_10 = arith.constant 0.000000e+00 : f32
    %13 = vector.broadcast %cst_10 : f32 to vector<2x1x9x1x128xf32>
    %c0_11 = arith.constant 0 : index
    %c0_12 = arith.constant 0 : index
    %c0_13 = arith.constant 0 : index
    %c0_14 = arith.constant 0 : index
    %c0_15 = arith.constant 0 : index
    %14 = vector.load %arg15[%c0_11, %c0_12, %c0_13, %c0_14, %c0_15] : memref<2x2x9x9x128xf32, #tpu.memory_space<vmem>>, vector<1x2x1x9x128xf32>
    tpu.vector_store %arg15[%c0_11, %c0_12, %c0_13, %c0_14, %c0_15], %12 {strides = array<i32>} : memref<2x2x9x9x128xf32, #tpu.memory_space<vmem>>, vector<1x2x1x9x128xf32>,
    %c1 = arith.constant 1 : index
    %c0_16 = arith.constant 0 : index
    %c8 = arith.constant 8 : index
    %c0_17 = arith.constant 0 : index
    %c0_18 = arith.constant 0 : index
    %15 = vector.load %arg15[%c1, %c0_16, %c8, %c0_17, %c0_18] : memref<2x2x9x9x128xf32, #tpu.memory_space<vmem>>, vector<1x2x1x9x128xf32>
    tpu.vector_store %arg15[%c1, %c0_16, %c8, %c0_17, %c0_18], %12 {strides = array<i32>} : memref<2x2x9x9x128xf32, #tpu.memory_space<vmem>>, vector<1x2x1x9x128xf32>,
    %c0_19 = arith.constant 0 : index
    %c0_20 = arith.constant 0 : index
    %c0_21 = arith.constant 0 : index
    %c0_22 = arith.constant 0 : index
    %c0_23 = arith.constant 0 : index
    %16 = vector.load %arg15[%c0_19, %c0_20, %c0_21, %c0_22, %c0_23] : memref<2x2x9x9x128xf32, #tpu.memory_space<vmem>>, vector<2x1x9x1x128xf32>
    tpu.vector_store %arg15[%c0_19, %c0_20, %c0_21, %c0_22, %c0_23], %13 {strides = array<i32>} : memref<2x2x9x9x128xf32, #tpu.memory_space<vmem>>, vector<2x1x9x1x128xf32>,
    %c0_24 = arith.constant 0 : index
    %c1_25 = arith.constant 1 : index
    %c0_26 = arith.constant 0 : index
    %c8_27 = arith.constant 8 : index
    %c0_28 = arith.constant 0 : index
    %17 = vector.load %arg15[%c0_24, %c1_25, %c0_26, %c8_27, %c0_28] : memref<2x2x9x9x128xf32, #tpu.memory_space<vmem>>, vector<2x1x9x1x128xf32>
    tpu.vector_store %arg15[%c0_24, %c1_25, %c0_26, %c8_27, %c0_28], %13 {strides = array<i32>} : memref<2x2x9x9x128xf32, #tpu.memory_space<vmem>>, vector<2x1x9x1x128xf32>,
    %18 = vector.extract_strided_slice %11 {offsets = [0, 0], sizes = [64, 128], strides = [1, 1]} : vector<256x128xf32> to vector<64x128xf32>
    %19 = vector.shape_cast %18 : vector<64x128xf32> to vector<8x8x128xf32>
    %20 = vector.shape_cast %19 : vector<8x8x128xf32> to vector<1x1x8x8x128xf32>
    %c1_29 = arith.constant 1 : index
    %c1_30 = arith.constant 1 : index
    %c0_31 = arith.constant 0 : index
    %c0_32 = arith.constant 0 : index
    %c0_33 = arith.constant 0 : index
    %21 = vector.load %arg15[%c1_29, %c1_30, %c0_31, %c0_32, %c0_33] : memref<2x2x9x9x128xf32, #tpu.memory_space<vmem>>, vector<1x1x8x8x128xf32>
    tpu.vector_store %arg15[%c1_29, %c1_30, %c0_31, %c0_32, %c0_33], %20 {strides = array<i32>} : memref<2x2x9x9x128xf32, #tpu.memory_space<vmem>>, vector<1x1x8x8x128xf32>,
    %22 = vector.extract_strided_slice %11 {offsets = [64, 0], sizes = [64, 128], strides = [1, 1]} : vector<256x128xf32> to vector<64x128xf32>
    %23 = vector.shape_cast %22 : vector<64x128xf32> to vector<8x8x128xf32>
    %24 = vector.shape_cast %23 : vector<8x8x128xf32> to vector<1x1x8x8x128xf32>
    %c1_34 = arith.constant 1 : index
    %c0_35 = arith.constant 0 : index
    %c0_36 = arith.constant 0 : index
    %c1_37 = arith.constant 1 : index
    %c0_38 = arith.constant 0 : index
    %25 = vector.load %arg15[%c1_34, %c0_35, %c0_36, %c1_37, %c0_38] : memref<2x2x9x9x128xf32, #tpu.memory_space<vmem>>, vector<1x1x8x8x128xf32>
    tpu.vector_store %arg15[%c1_34, %c0_35, %c0_36, %c1_37, %c0_38], %24 {strides = array<i32>} : memref<2x2x9x9x128xf32, #tpu.memory_space<vmem>>, vector<1x1x8x8x128xf32>,
    %26 = vector.extract_strided_slice %11 {offsets = [128, 0], sizes = [64, 128], strides = [1, 1]} : vector<256x128xf32> to vector<64x128xf32>
    %27 = vector.shape_cast %26 : vector<64x128xf32> to vector<8x8x128xf32>
    %28 = vector.shape_cast %27 : vector<8x8x128xf32> to vector<1x1x8x8x128xf32>
    %c0_39 = arith.constant 0 : index
    %c1_40 = arith.constant 1 : index
    %c1_41 = arith.constant 1 : index
    %c0_42 = arith.constant 0 : index
    %c0_43 = arith.constant 0 : index
    %29 = vector.load %arg15[%c0_39, %c1_40, %c1_41, %c0_42, %c0_43] : memref<2x2x9x9x128xf32, #tpu.memory_space<vmem>>, vector<1x1x8x8x128xf32>
    tpu.vector_store %arg15[%c0_39, %c1_40, %c1_41, %c0_42, %c0_43], %28 {strides = array<i32>} : memref<2x2x9x9x128xf32, #tpu.memory_space<vmem>>, vector<1x1x8x8x128xf32>,
    %30 = vector.extract_strided_slice %11 {offsets = [192, 0], sizes = [64, 128], strides = [1, 1]} : vector<256x128xf32> to vector<64x128xf32>
    %31 = vector.shape_cast %30 : vector<64x128xf32> to vector<8x8x128xf32>
    %32 = vector.shape_cast %31 : vector<8x8x128xf32> to vector<1x1x8x8x128xf32>
    %c0_44 = arith.constant 0 : index
    %c0_45 = arith.constant 0 : index
    %c1_46 = arith.constant 1 : index
    %c1_47 = arith.constant 1 : index
    %c0_48 = arith.constant 0 : index
    %33 = vector.load %arg15[%c0_44, %c0_45, %c1_46, %c1_47, %c0_48] : memref<2x2x9x9x128xf32, #tpu.memory_space<vmem>>, vector<1x1x8x8x128xf32>
    tpu.vector_store %arg15[%c0_44, %c0_45, %c1_46, %c1_47, %c0_48], %32 {strides = array<i32>} : memref<2x2x9x9x128xf32, #tpu.memory_space<vmem>>, vector<1x1x8x8x128xf32>,
    %c0_49 = arith.constant 0 : index
    %c0_50 = arith.constant 0 : index
    %c0_51 = arith.constant 0 : index
    %c0_52 = arith.constant 0 : index
    %c0_53 = arith.constant 0 : index
    %34 = vector.load %arg15[%c0_49, %c0_50, %c0_51, %c0_52, %c0_53] : memref<2x2x9x9x128xf32, #tpu.memory_space<vmem>>, vector<1x1x8x8x128xf32>
    %35 = vector.shape_cast %34 : vector<1x1x8x8x128xf32> to vector<64x128xf32>
    %c0_54 = arith.constant 0 : index
    %c0_55 = arith.constant 0 : index
    %c0_56 = arith.constant 0 : index
    %36 = vector.load %arg5[%c0_54, %c0_55, %c0_56] : memref<9x128x128xf32, #tpu.memory_space<vmem>>, vector<1x128x128xf32>
    %37 = vector.shape_cast %36 : vector<1x128x128xf32> to vector<128x128xf32>
    %cst_57 = arith.constant dense<0.000000e+00> : vector<64x128xf32>
    %38 = tpu.matmul %35, %37, %cst_57 {dimension_numbers = #tpu.dot_dimension_numbers<[1], [0], [0], [1], [0, 0, 1, 1], [], []>} : vector<64x128xf32>, vector<128x128xf32>, vector<64x128xf32> -> vector<64x128xf32>
    %c0_58 = arith.constant 0 : index
    %c1_59 = arith.constant 1 : index
    %c0_60 = arith.constant 0 : index
    %c0_61 = arith.constant 0 : index
    %c0_62 = arith.constant 0 : index
    %39 = vector.load %arg15[%c0_58, %c1_59, %c0_60, %c0_61, %c0_62] : memref<2x2x9x9x128xf32, #tpu.memory_space<vmem>>, vector<1x1x8x8x128xf32>
    %40 = vector.shape_cast %39 : vector<1x1x8x8x128xf32> to vector<64x128xf32>
    %c1_63 = arith.constant 1 : index
    %c0_64 = arith.constant 0 : index
    %c0_65 = arith.constant 0 : index
    %41 = vector.load %arg5[%c1_63, %c0_64, %c0_65] : memref<9x128x128xf32, #tpu.memory_space<vmem>>, vector<1x128x128xf32>
    %42 = vector.shape_cast %41 : vector<1x128x128xf32> to vector<128x128xf32>
    %cst_66 = arith.constant dense<0.000000e+00> : vector<64x128xf32>
    %43 = tpu.matmul %40, %42, %cst_66 {dimension_numbers = #tpu.dot_dimension_numbers<[1], [0], [0], [1], [0, 0, 1, 1], [], []>} : vector<64x128xf32>, vector<128x128xf32>, vector<64x128xf32> -> vector<64x128xf32>
    %44 = arith.addf %38, %43 : vector<64x128xf32>
    %c0_67 = arith.constant 0 : index
    %c0_68 = arith.constant 0 : index
    %c0_69 = arith.constant 0 : index
    %c1_70 = arith.constant 1 : index
    %c0_71 = arith.constant 0 : index
    %45 = vector.load %arg15[%c0_67, %c0_68, %c0_69, %c1_70, %c0_71] : memref<2x2x9x9x128xf32, #tpu.memory_space<vmem>>, vector<1x1x8x8x128xf32>
    %46 = vector.shape_cast %45 : vector<1x1x8x8x128xf32> to vector<64x128xf32>
    %c2 = arith.constant 2 : index
    %c0_72 = arith.constant 0 : index
    %c0_73 = arith.constant 0 : index
    %47 = vector.load %arg5[%c2, %c0_72, %c0_73] : memref<9x128x128xf32, #tpu.memory_space<vmem>>, vector<1x128x128xf32>
    %48 = vector.shape_cast %47 : vector<1x128x128xf32> to vector<128x128xf32>
    %cst_74 = arith.constant dense<0.000000e+00> : vector<64x128xf32>
    %49 = tpu.matmul %46, %48, %cst_74 {dimension_numbers = #tpu.dot_dimension_numbers<[1], [0], [0], [1], [0, 0, 1, 1], [], []>} : vector<64x128xf32>, vector<128x128xf32>, vector<64x128xf32> -> vector<64x128xf32>
    %50 = arith.addf %44, %49 : vector<64x128xf32>
    %c1_75 = arith.constant 1 : index
    %c0_76 = arith.constant 0 : index
    %c0_77 = arith.constant 0 : index
    %c0_78 = arith.constant 0 : index
    %c0_79 = arith.constant 0 : index
    %51 = vector.load %arg15[%c1_75, %c0_76, %c0_77, %c0_78, %c0_79] : memref<2x2x9x9x128xf32, #tpu.memory_space<vmem>>, vector<1x1x8x8x128xf32>
    %52 = vector.shape_cast %51 : vector<1x1x8x8x128xf32> to vector<64x128xf32>
    %c3 = arith.constant 3 : index
    %c0_80 = arith.constant 0 : index
    %c0_81 = arith.constant 0 : index
    %53 = vector.load %arg5[%c3, %c0_80, %c0_81] : memref<9x128x128xf32, #tpu.memory_space<vmem>>, vector<1x128x128xf32>
    %54 = vector.shape_cast %53 : vector<1x128x128xf32> to vector<128x128xf32>
    %cst_82 = arith.constant dense<0.000000e+00> : vector<64x128xf32>
    %55 = tpu.matmul %52, %54, %cst_82 {dimension_numbers = #tpu.dot_dimension_numbers<[1], [0], [0], [1], [0, 0, 1, 1], [], []>} : vector<64x128xf32>, vector<128x128xf32>, vector<64x128xf32> -> vector<64x128xf32>
    %56 = arith.addf %50, %55 : vector<64x128xf32>
    %c1_83 = arith.constant 1 : index
    %c1_84 = arith.constant 1 : index
    %c0_85 = arith.constant 0 : index
    %c0_86 = arith.constant 0 : index
    %c0_87 = arith.constant 0 : index
    %57 = vector.load %arg15[%c1_83, %c1_84, %c0_85, %c0_86, %c0_87] : memref<2x2x9x9x128xf32, #tpu.memory_space<vmem>>, vector<1x1x8x8x128xf32>
    %58 = vector.shape_cast %57 : vector<1x1x8x8x128xf32> to vector<64x128xf32>
    %c4 = arith.constant 4 : index
    %c0_88 = arith.constant 0 : index
    %c0_89 = arith.constant 0 : index
    %59 = vector.load %arg5[%c4, %c0_88, %c0_89] : memref<9x128x128xf32, #tpu.memory_space<vmem>>, vector<1x128x128xf32>
    %60 = vector.shape_cast %59 : vector<1x128x128xf32> to vector<128x128xf32>
    %cst_90 = arith.constant dense<0.000000e+00> : vector<64x128xf32>
    %61 = tpu.matmul %58, %60, %cst_90 {dimension_numbers = #tpu.dot_dimension_numbers<[1], [0], [0], [1], [0, 0, 1, 1], [], []>} : vector<64x128xf32>, vector<128x128xf32>, vector<64x128xf32> -> vector<64x128xf32>
    %62 = arith.addf %56, %61 : vector<64x128xf32>
    %c1_91 = arith.constant 1 : index
    %c0_92 = arith.constant 0 : index
    %c0_93 = arith.constant 0 : index
    %c1_94 = arith.constant 1 : index
    %c0_95 = arith.constant 0 : index
    %63 = vector.load %arg15[%c1_91, %c0_92, %c0_93, %c1_94, %c0_95] : memref<2x2x9x9x128xf32, #tpu.memory_space<vmem>>, vector<1x1x8x8x128xf32>
    %64 = vector.shape_cast %63 : vector<1x1x8x8x128xf32> to vector<64x128xf32>
    %c5 = arith.constant 5 : index
    %c0_96 = arith.constant 0 : index
    %c0_97 = arith.constant 0 : index
    %65 = vector.load %arg5[%c5, %c0_96, %c0_97] : memref<9x128x128xf32, #tpu.memory_space<vmem>>, vector<1x128x128xf32>
    %66 = vector.shape_cast %65 : vector<1x128x128xf32> to vector<128x128xf32>
    %cst_98 = arith.constant dense<0.000000e+00> : vector<64x128xf32>
    %67 = tpu.matmul %64, %66, %cst_98 {dimension_numbers = #tpu.dot_dimension_numbers<[1], [0], [0], [1], [0, 0, 1, 1], [], []>} : vector<64x128xf32>, vector<128x128xf32>, vector<64x128xf32> -> vector<64x128xf32>
    %68 = arith.addf %62, %67 : vector<64x128xf32>
    %c0_99 = arith.constant 0 : index
    %c0_100 = arith.constant 0 : index
    %c1_101 = arith.constant 1 : index
    %c0_102 = arith.constant 0 : index
    %c0_103 = arith.constant 0 : index
    %69 = vector.load %arg15[%c0_99, %c0_100, %c1_101, %c0_102, %c0_103] : memref<2x2x9x9x128xf32, #tpu.memory_space<vmem>>, vector<1x1x8x8x128xf32>
    %70 = vector.shape_cast %69 : vector<1x1x8x8x128xf32> to vector<64x128xf32>
    %c6 = arith.constant 6 : index
    %c0_104 = arith.constant 0 : index
    %c0_105 = arith.constant 0 : index
    %71 = vector.load %arg5[%c6, %c0_104, %c0_105] : memref<9x128x128xf32, #tpu.memory_space<vmem>>, vector<1x128x128xf32>
    %72 = vector.shape_cast %71 : vector<1x128x128xf32> to vector<128x128xf32>
    %cst_106 = arith.constant dense<0.000000e+00> : vector<64x128xf32>
    %73 = tpu.matmul %70, %72, %cst_106 {dimension_numbers = #tpu.dot_dimension_numbers<[1], [0], [0], [1], [0, 0, 1, 1], [], []>} : vector<64x128xf32>, vector<128x128xf32>, vector<64x128xf32> -> vector<64x128xf32>
    %74 = arith.addf %68, %73 : vector<64x128xf32>
    %c0_107 = arith.constant 0 : index
    %c1_108 = arith.constant 1 : index
    %c1_109 = arith.constant 1 : index
    %c0_110 = arith.constant 0 : index
    %c0_111 = arith.constant 0 : index
    %75 = vector.load %arg15[%c0_107, %c1_108, %c1_109, %c0_110, %c0_111] : memref<2x2x9x9x128xf32, #tpu.memory_space<vmem>>, vector<1x1x8x8x128xf32>
    %76 = vector.shape_cast %75 : vector<1x1x8x8x128xf32> to vector<64x128xf32>
    %c7 = arith.constant 7 : index
    %c0_112 = arith.constant 0 : index
    %c0_113 = arith.constant 0 : index
    %77 = vector.load %arg5[%c7, %c0_112, %c0_113] : memref<9x128x128xf32, #tpu.memory_space<vmem>>, vector<1x128x128xf32>
    %78 = vector.shape_cast %77 : vector<1x128x128xf32> to vector<128x128xf32>
    %cst_114 = arith.constant dense<0.000000e+00> : vector<64x128xf32>
    %79 = tpu.matmul %76, %78, %cst_114 {dimension_numbers = #tpu.dot_dimension_numbers<[1], [0], [0], [1], [0, 0, 1, 1], [], []>} : vector<64x128xf32>, vector<128x128xf32>, vector<64x128xf32> -> vector<64x128xf32>
    %80 = arith.addf %74, %79 : vector<64x128xf32>
    %c0_115 = arith.constant 0 : index
    %c0_116 = arith.constant 0 : index
    %c1_117 = arith.constant 1 : index
    %c1_118 = arith.constant 1 : index
    %c0_119 = arith.constant 0 : index
    %81 = vector.load %arg15[%c0_115, %c0_116, %c1_117, %c1_118, %c0_119] : memref<2x2x9x9x128xf32, #tpu.memory_space<vmem>>, vector<1x1x8x8x128xf32>
    %82 = vector.shape_cast %81 : vector<1x1x8x8x128xf32> to vector<64x128xf32>
    %c8_120 = arith.constant 8 : index
    %c0_121 = arith.constant 0 : index
    %c0_122 = arith.constant 0 : index
    %83 = vector.load %arg5[%c8_120, %c0_121, %c0_122] : memref<9x128x128xf32, #tpu.memory_space<vmem>>, vector<1x128x128xf32>
    %84 = vector.shape_cast %83 : vector<1x128x128xf32> to vector<128x128xf32>
    %cst_123 = arith.constant dense<0.000000e+00> : vector<64x128xf32>
    %85 = tpu.matmul %82, %84, %cst_123 {dimension_numbers = #tpu.dot_dimension_numbers<[1], [0], [0], [1], [0, 0, 1, 1], [], []>} : vector<64x128xf32>, vector<128x128xf32>, vector<64x128xf32> -> vector<64x128xf32>
    %86 = arith.addf %80, %85 : vector<64x128xf32>
    %c0_124 = arith.constant 0 : index
    %c0_125 = arith.constant 0 : index
    %87 = vector.load %arg6[%c0_124, %c0_125] : memref<1x128xf32, #tpu.memory_space<vmem>>, vector<1x128xf32>
    %88 = vector.broadcast %87 : vector<1x128xf32> to vector<64x128xf32>
    %89 = arith.mulf %86, %88 : vector<64x128xf32>
    %c0_126 = arith.constant 0 : index
    %c0_127 = arith.constant 0 : index
    %90 = vector.load %arg7[%c0_126, %c0_127] : memref<1x128xf32, #tpu.memory_space<vmem>>, vector<1x128xf32>
    %91 = vector.broadcast %90 : vector<1x128xf32> to vector<64x128xf32>
    %92 = arith.addf %89, %91 : vector<64x128xf32>
    %cst_128 = arith.constant 0.000000e+00 : f32
    %93 = vector.broadcast %cst_128 : f32 to vector<64x128xf32>
    %94 = arith.maximumf %92, %93 : vector<64x128xf32>
    %c0_129 = arith.constant 0 : index
    %c0_130 = arith.constant 0 : index
    %95 = vector.load %arg8[%c0_129, %c0_130] : memref<128x128xf32, #tpu.memory_space<vmem>>, vector<128x128xf32>
    %cst_131 = arith.constant dense<0.000000e+00> : vector<64x128xf32>
    %96 = tpu.matmul %94, %95, %cst_131 {dimension_numbers = #tpu.dot_dimension_numbers<[1], [0], [0], [1], [0, 0, 1, 1], [], []>} : vector<64x128xf32>, vector<128x128xf32>, vector<64x128xf32> -> vector<64x128xf32>
    %c0_132 = arith.constant 0 : index
    %c0_133 = arith.constant 0 : index
    %97 = vector.load %arg9[%c0_132, %c0_133] : memref<1x128xf32, #tpu.memory_space<vmem>>, vector<1x128xf32>
    %98 = vector.broadcast %97 : vector<1x128xf32> to vector<64x128xf32>
    %99 = arith.mulf %96, %98 : vector<64x128xf32>
    %c0_134 = arith.constant 0 : index
    %c0_135 = arith.constant 0 : index
    %100 = vector.load %arg10[%c0_134, %c0_135] : memref<1x128xf32, #tpu.memory_space<vmem>>, vector<1x128xf32>
    %101 = vector.broadcast %100 : vector<1x128xf32> to vector<64x128xf32>
    %102 = arith.addf %99, %101 : vector<64x128xf32>
    %103 = vector.extract_strided_slice %1 {offsets = [0, 0], sizes = [64, 128], strides = [1, 1]} : vector<256x128xf32> to vector<64x128xf32>
    %c0_136 = arith.constant 0 : index
    %c0_137 = arith.constant 0 : index
    %104 = vector.load %arg11[%c0_136, %c0_137] : memref<128x128xf32, #tpu.memory_space<vmem>>, vector<128x128xf32>
    %cst_138 = arith.constant dense<0.000000e+00> : vector<64x128xf32>
    %105 = tpu.matmul %103, %104, %cst_138 {dimension_numbers = #tpu.dot_dimension_numbers<[1], [0], [0], [1], [0, 0, 1, 1], [], []>} : vector<64x128xf32>, vector<128x128xf32>, vector<64x128xf32> -> vector<64x128xf32>
    %c0_139 = arith.constant 0 : index
    %c0_140 = arith.constant 0 : index
    %106 = vector.load %arg12[%c0_139, %c0_140] : memref<1x128xf32, #tpu.memory_space<vmem>>, vector<1x128xf32>
    %107 = vector.broadcast %106 : vector<1x128xf32> to vector<64x128xf32>
    %108 = arith.mulf %105, %107 : vector<64x128xf32>
    %c0_141 = arith.constant 0 : index
    %c0_142 = arith.constant 0 : index
    %109 = vector.load %arg13[%c0_141, %c0_142] : memref<1x128xf32, #tpu.memory_space<vmem>>, vector<1x128xf32>
    %110 = vector.broadcast %109 : vector<1x128xf32> to vector<64x128xf32>
    %111 = arith.addf %108, %110 : vector<64x128xf32>
    %112 = arith.addf %102, %111 : vector<64x128xf32>
    %cst_143 = arith.constant 0.000000e+00 : f32
    %113 = vector.broadcast %cst_143 : f32 to vector<64x128xf32>
    %114 = arith.maximumf %112, %113 : vector<64x128xf32>
    %115 = vector.shape_cast %114 : vector<64x128xf32> to vector<1x64x128xf32>
    %c0_144 = arith.constant 0 : index
    %c0_145 = arith.constant 0 : index
    %c0_146 = arith.constant 0 : index
    %116 = vector.load %arg14[%c0_144, %c0_145, %c0_146] : memref<1x64x128xf32, #tpu.memory_space<vmem>>, vector<1x64x128xf32>
    tpu.vector_store %arg14[%c0_144, %c0_145, %c0_146], %115 {strides = array<i32>} : memref<1x64x128xf32, #tpu.memory_space<vmem>>, vector<1x64x128xf32>,
    return
  }
  func.func @transform_0(%arg0: i32) -> (i32, i32, i32) {
    %c0_i32 = arith.constant 0 : i32
    %c0_i32_0 = arith.constant 0 : i32
    %c0_i32_1 = arith.constant 0 : i32
    return %arg0, %c0_i32, %c0_i32_0 : i32, i32, i32
  }
  func.func @transform_1(%arg0: i32) -> (i32, i32) {
    %c0_i32 = arith.constant 0 : i32
    %c0_i32_0 = arith.constant 0 : i32
    %c0_i32_1 = arith.constant 0 : i32
    return %c0_i32, %c0_i32_0 : i32, i32
  }
  func.func @transform_2(%arg0: i32) -> (i32, i32) {
    %c0_i32 = arith.constant 0 : i32
    %c0_i32_0 = arith.constant 0 : i32
    %c0_i32_1 = arith.constant 0 : i32
    return %c0_i32, %c0_i32_0 : i32, i32
  }
  func.func @transform_3(%arg0: i32) -> (i32, i32) {
    %c0_i32 = arith.constant 0 : i32
    %c0_i32_0 = arith.constant 0 : i32
    %c0_i32_1 = arith.constant 0 : i32
    return %c0_i32, %c0_i32_0 : i32, i32
  }
  func.func @transform_4(%arg0: i32) -> (i32, i32, i32) {
    %c0_i32 = arith.constant 0 : i32
    %c0_i32_0 = arith.constant 0 : i32
    %c0_i32_1 = arith.constant 0 : i32
    %c0_i32_2 = arith.constant 0 : i32
    return %c0_i32, %c0_i32_0, %c0_i32_1 : i32, i32, i32
  }
  func.func @transform_5(%arg0: i32) -> (i32, i32) {
    %c0_i32 = arith.constant 0 : i32
    %c0_i32_0 = arith.constant 0 : i32
    %c0_i32_1 = arith.constant 0 : i32
    return %c0_i32, %c0_i32_0 : i32, i32
  }
  func.func @transform_6(%arg0: i32) -> (i32, i32) {
    %c0_i32 = arith.constant 0 : i32
    %c0_i32_0 = arith.constant 0 : i32
    %c0_i32_1 = arith.constant 0 : i32
    return %c0_i32, %c0_i32_0 : i32, i32
  }
  func.func @transform_7(%arg0: i32) -> (i32, i32) {
    %c0_i32 = arith.constant 0 : i32
    %c0_i32_0 = arith.constant 0 : i32
    %c0_i32_1 = arith.constant 0 : i32
    return %c0_i32, %c0_i32_0 : i32, i32
  }
  func.func @transform_8(%arg0: i32) -> (i32, i32) {
    %c0_i32 = arith.constant 0 : i32
    %c0_i32_0 = arith.constant 0 : i32
    %c0_i32_1 = arith.constant 0 : i32
    return %c0_i32, %c0_i32_0 : i32, i32
  }
  func.func @transform_9(%arg0: i32) -> (i32, i32) {
    %c0_i32 = arith.constant 0 : i32
    %c0_i32_0 = arith.constant 0 : i32
    %c0_i32_1 = arith.constant 0 : i32
    return %c0_i32, %c0_i32_0 : i32, i32
  }
  func.func @transform_10(%arg0: i32) -> (i32, i32) {
    %c0_i32 = arith.constant 0 : i32
    %c0_i32_0 = arith.constant 0 : i32
    %c0_i32_1 = arith.constant 0 : i32
    return %c0_i32, %c0_i32_0 : i32, i32
  }
  func.func @transform_11(%arg0: i32) -> (i32, i32) {
    %c0_i32 = arith.constant 0 : i32
    %c0_i32_0 = arith.constant 0 : i32
    %c0_i32_1 = arith.constant 0 : i32
    return %c0_i32, %c0_i32_0 : i32, i32
  }
  func.func @transform_12(%arg0: i32) -> (i32, i32) {
    %c0_i32 = arith.constant 0 : i32
    %c0_i32_0 = arith.constant 0 : i32
    %c0_i32_1 = arith.constant 0 : i32
    return %c0_i32, %c0_i32_0 : i32, i32
  }
  func.func @transform_13(%arg0: i32) -> (i32, i32, i32) {
    %c0_i32 = arith.constant 0 : i32
    %c0_i32_0 = arith.constant 0 : i32
    %c0_i32_1 = arith.constant 0 : i32
    return %arg0, %c0_i32, %c0_i32_0 : i32, i32, i32
  }
}

</mosaic_0001>

<llo_original>
// kernel: tpu_custom_call.1
$region0: #{tpu_custom_call.1}
  #allocation0 [shape = 'u32[]', space=smem, size = 0x4, offset = 0x4, fixed_abs, tag = 'smem constant byte address 0x4 - core index']
  #allocation1 [shape = 'u32[72,128]{1,0:T(1,128)}', space=vmem, size = 0x9000, scoped, tag = 'internal scratch']
  #allocation2 [shape = 'f32[2,2,9,9,128]{4,3,2,1,0:T(8,128)}', space=vmem, size = 0x48000, scoped, tag = 'scratch operand']
  %s0 = inlined_call_operand.hbm [shape: f32[2,256,128], index: 0, kind: input, shape index: {}]
  %s1 = inlined_call_operand.hbm [shape: f32[128,128], index: 1, kind: input, shape index: {}]
  %s2 = inlined_call_operand.vmem [shape: f32[1,128], index: 2, kind: input, shape index: {}]
  %s3 = inlined_call_operand.vmem [shape: f32[1,128], index: 3, kind: input, shape index: {}]
  %s4 = inlined_call_operand.hbm [shape: f32[9,128,128], index: 4, kind: input, shape index: {}]
  %s5 = inlined_call_operand.vmem [shape: f32[1,128], index: 5, kind: input, shape index: {}]
  %s6 = inlined_call_operand.vmem [shape: f32[1,128], index: 6, kind: input, shape index: {}]
  %s7 = inlined_call_operand.hbm [shape: f32[128,128], index: 7, kind: input, shape index: {}]
  %s8 = inlined_call_operand.vmem [shape: f32[1,128], index: 8, kind: input, shape index: {}]
  %s9 = inlined_call_operand.vmem [shape: f32[1,128], index: 9, kind: input, shape index: {}]
  %s10 = inlined_call_operand.hbm [shape: f32[128,128], index: 10, kind: input, shape index: {}]
  %s11 = inlined_call_operand.vmem [shape: f32[1,128], index: 11, kind: input, shape index: {}]
  %s12 = inlined_call_operand.vmem [shape: f32[1,128], index: 12, kind: input, shape index: {}]
  %s13 = inlined_call_operand.hbm [shape: f32[2,64,128], index: 13, kind: output, shape index: {}]
  %s14 = sld [smem:[#allocation0]]
  $region105: #{tpu_custom_call.1} parent=0
    _
  %s16 = ssub.s32 1, %s14
  %s17 = scalar_select 0, %s16, %s14
  $region1: #{tpu_custom_call.1} parent=0
    #allocation3 [shape = 'u8[262144]{0}', space=vmem, size = 0x40000, scoped, tag = 'input window, operand 0']
    #allocation4 [shape = 's32[2]{0}', space=sflag, size = 0x8, scoped, tag = 'scoped memory for tpu_custom_call.1']
    #allocation5 [shape = 's32[2]{0}', space=sflag, size = 0x8, scoped, tag = 'scoped memory for tpu_custom_call.1']
    #allocation6 [shape = 'u8[65536]{0}', space=vmem, size = 0x10000, scoped, tag = 'input window, operand 1, single buffered']
    #allocation7 [shape = 's32[1]{0}', space=sflag, size = 0x4, scoped, tag = 'scoped memory for tpu_custom_call.1']
    #allocation8 [shape = 'u8[589824]{0}', space=vmem, size = 0x90000, scoped, tag = 'input window, operand 4, single buffered']
    #allocation9 [shape = 'u8[65536]{0}', space=vmem, size = 0x10000, scoped, tag = 'input window, operand 7, single buffered']
    #allocation10 [shape = 's32[1]{0}', space=sflag, size = 0x4, scoped, tag = 'scoped memory for tpu_custom_call.1']
    #allocation11 [shape = 'u8[65536]{0}', space=vmem, size = 0x10000, scoped, tag = 'input window, operand 10, single buffered']
    #allocation12 [shape = 'u8[65536]{0}', space=vmem, size = 0x10000, scoped, tag = 'output window, operand 0']
    %18 = vsyncpa [#allocation4], 0
    %s19 = scalar_lea.sflag [#allocation4], 1
    %20 = vsyncpa %s19, 0
    %21 = vsyncpa [#allocation7], 0
    %22 = vsyncpa [#allocation10], 0
    %23 = vsyncpa [#allocation5], 0
    %s24 = scalar_lea.sflag [#allocation5], 1
    %25 = vsyncpa %s24, 0
    loop: start=0, step=1, limit=4
    $region2: #{tpu_custom_call.1} parent=1 // loop_pre_header
      _
    $region3: #{tpu_custom_call.1} parent=1 // loop_header
      %s27 = sphi 0, %s31
      %p28 = scmp.ge.s32.totalorder %s27, 4
      %s37 = sphi 0, %s39
      %s40 = sphi 0, %s37
      %s41 = sphi 0, %s40
      %s57 = sphi 0, %s41
      %s61 = sphi 0, %s61
      %s63 = sphi 0, %s61
      %s64 = sphi 0, %s63
      %s78 = sphi 0, %s64
      %s82 = sphi 0, %s82
      %s84 = sphi 0, %s82
      %s85 = sphi 0, %s84
      %s99 = sphi 0, %s85
      %s103 = sphi 0, %s103
      %s105 = sphi 0, %s103
      %s106 = sphi 0, %s105
      %s120 = sphi 0, %s106
      %s124 = sphi 0, %s124
      %s126 = sphi 0, %s124
      %s127 = sphi 0, %s126
      %s141 = sphi 0, %s127
      %s145 = sphi 0, %s145
      %s147 = sphi 0, %s145
      %s148 = sphi 0, %s147
      %s162 = sphi 0, %s148
      %s166 = sphi 0, %s166
      %s168 = sphi 0, %s166
      %s169 = sphi 0, %s168
      %s183 = sphi 0, %s169
      %s187 = sphi 0, %s187
      %s189 = sphi 0, %s187
      %s190 = sphi 0, %s189
      %s204 = sphi 0, %s190
      %s208 = sphi 0, %s208
      %s210 = sphi 0, %s208
      %s211 = sphi 0, %s210
      %s225 = sphi 0, %s211
      %s229 = sphi 0, %s229
      %s231 = sphi 0, %s229
      %s232 = sphi 0, %s231
      %s246 = sphi 0, %s232
      %s250 = sphi 0, %s250
      %s252 = sphi 0, %s250
      %s253 = sphi 0, %s252
      %s267 = sphi 0, %s253
      %s271 = sphi 0, %s271
      %s273 = sphi 0, %s271
      %s274 = sphi 0, %s273
      %s288 = sphi 0, %s274
      %s292 = sphi 0, %s292
      %s294 = sphi 0, %s292
      %s295 = sphi 0, %s294
      %s309 = sphi 0, %s295
      %s315 = sphi 0, %s317
      %s318 = sphi 0, %s315
      %s319 = sphi 0, %s318
      %s335 = sphi 0, %s319
    $region4: #{tpu_custom_call.1} parent=1 // loop_header_branch
      %30 = sbr.rel (%p28) target = $region8
    $region5: #{tpu_custom_call.1} parent=1 // loop_body
      %s32 = ssub.s32 %s27, 1
      %s33 = ssub.s32 %s27, 2
      %s34 = sadd.s32 %s27, 1
      %s35 = ssub.s32 %s27, %s34
      %p36 = scmp.eq.s32.totalorder %s35, 0
      %s38 = sadd.s32 %s37, 1
      %s39 = scalar_select %p36, %s37, %s38
      %p42 = pneg %p36
      %p43 = scmp.eq.s32.totalorder %s27, 1
      %p44 = por %p42, %p43
      %p45 = scmp.ne.s32.totalorder %s37, %s40
      %p46 = scmp.eq.s32.totalorder %s27, 0
      %p47 = por %p45, %p46
      %p48 = scmp.ne.s32.totalorder %s37, %s40
      %p49 = scmp.eq.s32.totalorder %s32, 1
      %p50 = por %p48, %p49
      %p51 = scmp.ne.s32.totalorder %s40, %s41
      %p52 = scmp.eq.s32.totalorder %s32, 0
      %p53 = por %p51, %p52
      %p54 = scmp.ne.s32.totalorder %s40, %s41
      %p55 = scmp.eq.s32.totalorder %s33, 1
      %p56 = por %p54, %p55
      %p58 = scmp.ne.s32.totalorder %s41, %s57
      %p59 = scmp.eq.s32.totalorder %s33, 0
      %p60 = por %p58, %p59
      %s62 = sadd.s32 %s61, 1
      %p65 = scmp.eq.s32.totalorder %s27, 1
      %p66 = scmp.ne.s32.totalorder %s61, %s63
      %p67 = scmp.eq.s32.totalorder %s27, 0
      %p68 = por %p66, %p67
      %p69 = scmp.ne.s32.totalorder %s61, %s63
      %p70 = scmp.eq.s32.totalorder %s32, 1
      %p71 = por %p69, %p70
      %p72 = scmp.ne.s32.totalorder %s63, %s64
      %p73 = scmp.eq.s32.totalorder %s32, 0
      %p74 = por %p72, %p73
      %p75 = scmp.ne.s32.totalorder %s63, %s64
      %p76 = scmp.eq.s32.totalorder %s33, 1
      %p77 = por %p75, %p76
      %p79 = scmp.ne.s32.totalorder %s64, %s78
      %p80 = scmp.eq.s32.totalorder %s33, 0
      %p81 = por %p79, %p80
      %s83 = sadd.s32 %s82, 1
      %p86 = scmp.eq.s32.totalorder %s27, 1
      %p87 = scmp.ne.s32.totalorder %s82, %s84
      %p88 = scmp.eq.s32.totalorder %s27, 0
      %p89 = por %p87, %p88
      %p90 = scmp.ne.s32.totalorder %s82, %s84
      %p91 = scmp.eq.s32.totalorder %s32, 1
      %p92 = por %p90, %p91
      %p93 = scmp.ne.s32.totalorder %s84, %s85
      %p94 = scmp.eq.s32.totalorder %s32, 0
      %p95 = por %p93, %p94
      %p96 = scmp.ne.s32.totalorder %s84, %s85
      %p97 = scmp.eq.s32.totalorder %s33, 1
      %p98 = por %p96, %p97
      %p100 = scmp.ne.s32.totalorder %s85, %s99
      %p101 = scmp.eq.s32.totalorder %s33, 0
      %p102 = por %p100, %p101
      %s104 = sadd.s32 %s103, 1
      %p107 = scmp.eq.s32.totalorder %s27, 1
      %p108 = scmp.ne.s32.totalorder %s103, %s105
      %p109 = scmp.eq.s32.totalorder %s27, 0
      %p110 = por %p108, %p109
      %p111 = scmp.ne.s32.totalorder %s103, %s105
      %p112 = scmp.eq.s32.totalorder %s32, 1
      %p113 = por %p111, %p112
      %p114 = scmp.ne.s32.totalorder %s105, %s106
      %p115 = scmp.eq.s32.totalorder %s32, 0
      %p116 = por %p114, %p115
      %p117 = scmp.ne.s32.totalorder %s105, %s106
      %p118 = scmp.eq.s32.totalorder %s33, 1
      %p119 = por %p117, %p118
      %p121 = scmp.ne.s32.totalorder %s106, %s120
      %p122 = scmp.eq.s32.totalorder %s33, 0
      %p123 = por %p121, %p122
      %s125 = sadd.s32 %s124, 1
      %p128 = scmp.eq.s32.totalorder %s27, 1
      %p129 = scmp.ne.s32.totalorder %s124, %s126
      %p130 = scmp.eq.s32.totalorder %s27, 0
      %p131 = por %p129, %p130
      %p132 = scmp.ne.s32.totalorder %s124, %s126
      %p133 = scmp.eq.s32.totalorder %s32, 1
      %p134 = por %p132, %p133
      %p135 = scmp.ne.s32.totalorder %s126, %s127
      %p136 = scmp.eq.s32.totalorder %s32, 0
      %p137 = por %p135, %p136
      %p138 = scmp.ne.s32.totalorder %s126, %s127
      %p139 = scmp.eq.s32.totalorder %s33, 1
      %p140 = por %p138, %p139
      %p142 = scmp.ne.s32.totalorder %s127, %s141
      %p143 = scmp.eq.s32.totalorder %s33, 0
      %p144 = por %p142, %p143
      %s146 = sadd.s32 %s145, 1
      %p149 = scmp.eq.s32.totalorder %s27, 1
      %p150 = scmp.ne.s32.totalorder %s145, %s147
      %p151 = scmp.eq.s32.totalorder %s27, 0
      %p152 = por %p150, %p151
      %p153 = scmp.ne.s32.totalorder %s145, %s147
      %p154 = scmp.eq.s32.totalorder %s32, 1
      %p155 = por %p153, %p154
      %p156 = scmp.ne.s32.totalorder %s147, %s148
      %p157 = scmp.eq.s32.totalorder %s32, 0
      %p158 = por %p156, %p157
      %p159 = scmp.ne.s32.totalorder %s147, %s148
      %p160 = scmp.eq.s32.totalorder %s33, 1
      %p161 = por %p159, %p160
      %p163 = scmp.ne.s32.totalorder %s148, %s162
      %p164 = scmp.eq.s32.totalorder %s33, 0
      %p165 = por %p163, %p164
      %s167 = sadd.s32 %s166, 1
      %p170 = scmp.eq.s32.totalorder %s27, 1
      %p171 = scmp.ne.s32.totalorder %s166, %s168
      %p172 = scmp.eq.s32.totalorder %s27, 0
      %p173 = por %p171, %p172
      %p174 = scmp.ne.s32.totalorder %s166, %s168
      %p175 = scmp.eq.s32.totalorder %s32, 1
      %p176 = por %p174, %p175
      %p177 = scmp.ne.s32.totalorder %s168, %s169
      %p178 = scmp.eq.s32.totalorder %s32, 0
      %p179 = por %p177, %p178
      %p180 = scmp.ne.s32.totalorder %s168, %s169
      %p181 = scmp.eq.s32.totalorder %s33, 1
      %p182 = por %p180, %p181
      %p184 = scmp.ne.s32.totalorder %s169, %s183
      %p185 = scmp.eq.s32.totalorder %s33, 0
      %p186 = por %p184, %p185
      %s188 = sadd.s32 %s187, 1
      %p191 = scmp.eq.s32.totalorder %s27, 1
      %p192 = scmp.ne.s32.totalorder %s187, %s189
      %p193 = scmp.eq.s32.totalorder %s27, 0
      %p194 = por %p192, %p193
      %p195 = scmp.ne.s32.totalorder %s187, %s189
      %p196 = scmp.eq.s32.totalorder %s32, 1
      %p197 = por %p195, %p196
      %p198 = scmp.ne.s32.totalorder %s189, %s190
      %p199 = scmp.eq.s32.totalorder %s32, 0
      %p200 = por %p198, %p199
      %p201 = scmp.ne.s32.totalorder %s189, %s190
      %p202 = scmp.eq.s32.totalorder %s33, 1
      %p203 = por %p201, %p202
      %p205 = scmp.ne.s32.totalorder %s190, %s204
      %p206 = scmp.eq.s32.totalorder %s33, 0
      %p207 = por %p205, %p206
      %s209 = sadd.s32 %s208, 1
      %p212 = scmp.eq.s32.totalorder %s27, 1
      %p213 = scmp.ne.s32.totalorder %s208, %s210
      %p214 = scmp.eq.s32.totalorder %s27, 0
      %p215 = por %p213, %p214
      %p216 = scmp.ne.s32.totalorder %s208, %s210
      %p217 = scmp.eq.s32.totalorder %s32, 1
      %p218 = por %p216, %p217
      %p219 = scmp.ne.s32.totalorder %s210, %s211
      %p220 = scmp.eq.s32.totalorder %s32, 0
      %p221 = por %p219, %p220
      %p222 = scmp.ne.s32.totalorder %s210, %s211
      %p223 = scmp.eq.s32.totalorder %s33, 1
      %p224 = por %p222, %p223
      %p226 = scmp.ne.s32.totalorder %s211, %s225
      %p227 = scmp.eq.s32.totalorder %s33, 0
      %p228 = por %p226, %p227
      %s230 = sadd.s32 %s229, 1
      %p233 = scmp.eq.s32.totalorder %s27, 1
      %p234 = scmp.ne.s32.totalorder %s229, %s231
      %p235 = scmp.eq.s32.totalorder %s27, 0
      %p236 = por %p234, %p235
      %p237 = scmp.ne.s32.totalorder %s229, %s231
      %p238 = scmp.eq.s32.totalorder %s32, 1
      %p239 = por %p237, %p238
      %p240 = scmp.ne.s32.totalorder %s231, %s232
      %p241 = scmp.eq.s32.totalorder %s32, 0
      %p242 = por %p240, %p241
      %p243 = scmp.ne.s32.totalorder %s231, %s232
      %p244 = scmp.eq.s32.totalorder %s33, 1
      %p245 = por %p243, %p244
      %p247 = scmp.ne.s32.totalorder %s232, %s246
      %p248 = scmp.eq.s32.totalorder %s33, 0
      %p249 = por %p247, %p248
      %s251 = sadd.s32 %s250, 1
      %p254 = scmp.eq.s32.totalorder %s27, 1
      %p255 = scmp.ne.s32.totalorder %s250, %s252
      %p256 = scmp.eq.s32.totalorder %s27, 0
      %p257 = por %p255, %p256
      %p258 = scmp.ne.s32.totalorder %s250, %s252
      %p259 = scmp.eq.s32.totalorder %s32, 1
      %p260 = por %p258, %p259
      %p261 = scmp.ne.s32.totalorder %s252, %s253
      %p262 = scmp.eq.s32.totalorder %s32, 0
      %p263 = por %p261, %p262
      %p264 = scmp.ne.s32.totalorder %s252, %s253
      %p265 = scmp.eq.s32.totalorder %s33, 1
      %p266 = por %p264, %p265
      %p268 = scmp.ne.s32.totalorder %s253, %s267
      %p269 = scmp.eq.s32.totalorder %s33, 0
      %p270 = por %p268, %p269
      %s272 = sadd.s32 %s271, 1
      %p275 = scmp.eq.s32.totalorder %s27, 1
      %p276 = scmp.ne.s32.totalorder %s271, %s273
      %p277 = scmp.eq.s32.totalorder %s27, 0
      %p278 = por %p276, %p277
      %p279 = scmp.ne.s32.totalorder %s271, %s273
      %p280 = scmp.eq.s32.totalorder %s32, 1
      %p281 = por %p279, %p280
      %p282 = scmp.ne.s32.totalorder %s273, %s274
      %p283 = scmp.eq.s32.totalorder %s32, 0
      %p284 = por %p282, %p283
      %p285 = scmp.ne.s32.totalorder %s273, %s274
      %p286 = scmp.eq.s32.totalorder %s33, 1
      %p287 = por %p285, %p286
      %p289 = scmp.ne.s32.totalorder %s274, %s288
      %p290 = scmp.eq.s32.totalorder %s33, 0
      %p291 = por %p289, %p290
      %s293 = sadd.s32 %s292, 1
      %p296 = scmp.eq.s32.totalorder %s27, 1
      %p297 = scmp.ne.s32.totalorder %s292, %s294
      %p298 = scmp.eq.s32.totalorder %s27, 0
      %p299 = por %p297, %p298
      %p300 = scmp.ne.s32.totalorder %s292, %s294
      %p301 = scmp.eq.s32.totalorder %s32, 1
      %p302 = por %p300, %p301
      %p303 = scmp.ne.s32.totalorder %s294, %s295
      %p304 = scmp.eq.s32.totalorder %s32, 0
      %p305 = por %p303, %p304
      %p306 = scmp.ne.s32.totalorder %s294, %s295
      %p307 = scmp.eq.s32.totalorder %s33, 1
      %p308 = por %p306, %p307
      %p310 = scmp.ne.s32.totalorder %s295, %s309
      %p311 = scmp.eq.s32.totalorder %s33, 0
      %p312 = por %p310, %p311
      %s313 = ssub.s32 %s27, %s34
      %p314 = scmp.eq.s32.totalorder %s313, 0
      %s316 = sadd.s32 %s315, 1
      %s317 = scalar_select %p314, %s315, %s316
      %p320 = pneg %p314
      %p321 = scmp.eq.s32.totalorder %s27, 1
      %p322 = por %p320, %p321
      %p323 = scmp.ne.s32.totalorder %s315, %s318
      %p324 = scmp.eq.s32.totalorder %s27, 0
      %p325 = por %p323, %p324
      %p326 = scmp.ne.s32.totalorder %s315, %s318
      %p327 = scmp.eq.s32.totalorder %s32, 1
      %p328 = por %p326, %p327
      %p329 = scmp.ne.s32.totalorder %s318, %s319
      %p330 = scmp.eq.s32.totalorder %s32, 0
      %p331 = por %p329, %p330
      %p332 = scmp.ne.s32.totalorder %s318, %s319
      %p333 = scmp.eq.s32.totalorder %s33, 1
      %p334 = por %p332, %p333
      %p336 = scmp.ne.s32.totalorder %s319, %s335
      %p337 = scmp.eq.s32.totalorder %s33, 0
      %p338 = por %p336, %p337
      %p339 = scmp.le.s32.totalorder 1, %s27
      %p340 = scmp.lt.s32.totalorder %s27, 3
      %p341 = pnand %p339, %p340
      %p342 = pneg %p341
      // Predicated region
      $region9: #{tpu_custom_call.1} parent=5 // pred_check
        _
      $region10: #{tpu_custom_call.1} parent=5 // pred_check_branch
        %344 = sbr.rel (%p341) target = $region12
      $region11: #{tpu_custom_call.1} parent=5 // pred_region
        %s345 = ssub.s32 %s27, 1
        // Predicated region
        $region13: #{tpu_custom_call.1} parent=11 // pred_check
          %p346 = pneg %p74
        $region14: #{tpu_custom_call.1} parent=11 // pred_check_branch
          %348 = sbr.rel (%p346) target = $region16
        $region15: #{tpu_custom_call.1} parent=11 // pred_region
          %350 = vsyncadd [#allocation7], 0
          %s351 = sshll.u32 %s1, 4
          %s352 = int_to_ptr.hbm [resolvable:$true] %s351
          %s353 = sshll.u32 [#allocation6], 4
          %s354 = int_to_ptr.vmem [resolvable:$true] %s353
          %359 = dma.hbm_to_vmem [thread:$0]  %s352, 2048, %s354, [#allocation7], 128, 128, 8
        $region16: #{tpu_custom_call.1} parent=11 // pred_fallthru
          _
        // Predicated region
        $region17: #{tpu_custom_call.1} parent=11 // pred_check
          %p360 = pneg %p95
        $region18: #{tpu_custom_call.1} parent=11 // pred_check_branch
          %362 = sbr.rel (%p360) target = $region20
        $region19: #{tpu_custom_call.1} parent=11 // pred_region
          _
        $region20: #{tpu_custom_call.1} parent=11 // pred_fallthru
          _
        // Predicated region
        $region21: #{tpu_custom_call.1} parent=11 // pred_check
          %p363 = pneg %p116
        $region22: #{tpu_custom_call.1} parent=11 // pred_check_branch
          %365 = sbr.rel (%p363) target = $region24
        $region23: #{tpu_custom_call.1} parent=11 // pred_region
          _
        $region24: #{tpu_custom_call.1} parent=11 // pred_fallthru
          _
        // Predicated region
        $region25: #{tpu_custom_call.1} parent=11 // pred_check
          %p366 = pneg %p137
        $region26: #{tpu_custom_call.1} parent=11 // pred_check_branch
          %368 = sbr.rel (%p366) target = $region28
        $region27: #{tpu_custom_call.1} parent=11 // pred_region
          %370 = vsyncadd [#allocation7], 0
          %s371 = sshll.u32 %s4, 4
          %s372 = int_to_ptr.hbm [resolvable:$true] %s371
          %s373 = sshll.u32 [#allocation8], 4
          %s374 = int_to_ptr.vmem [resolvable:$true] %s373
          %379 = dma.hbm_to_vmem [thread:$0]  %s372, 18432, %s374, [#allocation7], 128, 128, 8
        $region28: #{tpu_custom_call.1} parent=11 // pred_fallthru
          _
        // Predicated region
        $region29: #{tpu_custom_call.1} parent=11 // pred_check
          %p380 = pneg %p158
        $region30: #{tpu_custom_call.1} parent=11 // pred_check_branch
          %382 = sbr.rel (%p380) target = $region32
        $region31: #{tpu_custom_call.1} parent=11 // pred_region
          _
        $region32: #{tpu_custom_call.1} parent=11 // pred_fallthru
          _
        // Predicated region
        $region33: #{tpu_custom_call.1} parent=11 // pred_check
          %p383 = pneg %p179
        $region34: #{tpu_custom_call.1} parent=11 // pred_check_branch
          %385 = sbr.rel (%p383) target = $region36
        $region35: #{tpu_custom_call.1} parent=11 // pred_region
          _
        $region36: #{tpu_custom_call.1} parent=11 // pred_fallthru
          _
        // Predicated region
        $region37: #{tpu_custom_call.1} parent=11 // pred_check
          %p386 = pneg %p200
        $region38: #{tpu_custom_call.1} parent=11 // pred_check_branch
          %388 = sbr.rel (%p386) target = $region40
        $region39: #{tpu_custom_call.1} parent=11 // pred_region
          %390 = vsyncadd [#allocation10], 0
          %s391 = sshll.u32 %s7, 4
          %s392 = int_to_ptr.hbm [resolvable:$true] %s391
          %s393 = sshll.u32 [#allocation9], 4
          %s394 = int_to_ptr.vmem [resolvable:$true] %s393
          %399 = dma.hbm_to_vmem [thread:$0]  %s392, 2048, %s394, [#allocation10], 128, 128, 8
        $region40: #{tpu_custom_call.1} parent=11 // pred_fallthru
          _
        // Predicated region
        $region41: #{tpu_custom_call.1} parent=11 // pred_check
          %p400 = pneg %p221
        $region42: #{tpu_custom_call.1} parent=11 // pred_check_branch
          %402 = sbr.rel (%p400) target = $region44
        $region43: #{tpu_custom_call.1} parent=11 // pred_region
          _
        $region44: #{tpu_custom_call.1} parent=11 // pred_fallthru
          _
        // Predicated region
        $region45: #{tpu_custom_call.1} parent=11 // pred_check
          %p403 = pneg %p242
        $region46: #{tpu_custom_call.1} parent=11 // pred_check_branch
          %405 = sbr.rel (%p403) target = $region48
        $region47: #{tpu_custom_call.1} parent=11 // pred_region
          _
        $region48: #{tpu_custom_call.1} parent=11 // pred_fallthru
          _
        // Predicated region
        $region49: #{tpu_custom_call.1} parent=11 // pred_check
          %p406 = pneg %p263
        $region50: #{tpu_custom_call.1} parent=11 // pred_check_branch
          %408 = sbr.rel (%p406) target = $region52
        $region51: #{tpu_custom_call.1} parent=11 // pred_region
          %410 = vsyncadd [#allocation10], 0
          %s411 = sshll.u32 %s10, 4
          %s412 = int_to_ptr.hbm [resolvable:$true] %s411
          %s413 = sshll.u32 [#allocation11], 4
          %s414 = int_to_ptr.vmem [resolvable:$true] %s413
          %419 = dma.hbm_to_vmem [thread:$0]  %s412, 2048, %s414, [#allocation10], 128, 128, 8
        $region52: #{tpu_custom_call.1} parent=11 // pred_fallthru
          _
        // Predicated region
        $region53: #{tpu_custom_call.1} parent=11 // pred_check
          %p420 = pneg %p284
        $region54: #{tpu_custom_call.1} parent=11 // pred_check_branch
          %422 = sbr.rel (%p420) target = $region56
        $region55: #{tpu_custom_call.1} parent=11 // pred_region
          _
        $region56: #{tpu_custom_call.1} parent=11 // pred_fallthru
          _
        // Predicated region
        $region57: #{tpu_custom_call.1} parent=11 // pred_check
          %p423 = pneg %p305
        $region58: #{tpu_custom_call.1} parent=11 // pred_check_branch
          %425 = sbr.rel (%p423) target = $region60
        $region59: #{tpu_custom_call.1} parent=11 // pred_region
          _
        $region60: #{tpu_custom_call.1} parent=11 // pred_fallthru
          _
      $region12: #{tpu_custom_call.1} parent=5 // pred_fallthru
        _
      %p426 = scmp.lt.s32.totalorder %s27, 2
      // Predicated region
      $region61: #{tpu_custom_call.1} parent=5 // pred_check
        %p427 = pneg %p426
      $region62: #{tpu_custom_call.1} parent=5 // pred_check_branch
        %429 = sbr.rel (%p427) target = $region64
      $region63: #{tpu_custom_call.1} parent=5 // pred_region
        // Predicated region
        $region65: #{tpu_custom_call.1} parent=63 // pred_check
          %p430 = pneg %p47
        $region66: #{tpu_custom_call.1} parent=63 // pred_check_branch
          %432 = sbr.rel (%p430) target = $region68
        $region67: #{tpu_custom_call.1} parent=63 // pred_region
          %s433 = sand.u32 %s37, 1
          %s434 = scalar_lea.sflag [#allocation4], %s433
          %s435 = sand.u32 %s37, 1
          %s436 = smul.addr %s435, 256
          %s437 = scalar_lea.vmem [#allocation3], %s436
          %439 = vsyncadd %s434, 0
          %s440 = smul.addr %s27, 32
          %s441 = smul.addr %s440, 8
          %s442 = scalar_lea.hbm %s0, %s441
          %s443 = sshll.u32 %s442, 4
          %s444 = int_to_ptr.hbm [resolvable:$true] %s443
          %s445 = sshll.u32 %s437, 4
          %s446 = int_to_ptr.vmem [resolvable:$true] %s445
          %451 = dma.hbm_to_vmem [thread:$0]  %s444, 4096, %s446, %s434, 128, 128, 8
        $region68: #{tpu_custom_call.1} parent=63 // pred_fallthru
          _
      $region64: #{tpu_custom_call.1} parent=5 // pred_fallthru
        _
      %p452 = scmp.le.s32.totalorder 1, %s27
      %p453 = scmp.lt.s32.totalorder %s27, 3
      %p454 = pnand %p452, %p453
      %p455 = pneg %p454
      // Predicated region
      $region69: #{tpu_custom_call.1} parent=5 // pred_check
        _
      $region70: #{tpu_custom_call.1} parent=5 // pred_check_branch
        %457 = sbr.rel (%p454) target = $region72
      $region71: #{tpu_custom_call.1} parent=5 // pred_region
        %s458 = ssub.s32 %s27, 1
        %s459 = sand.u32 %s40, 1
        %s460 = scalar_lea.sflag [#allocation4], %s459
        %s461 = sand.u32 %s40, 1
        %s462 = smul.addr %s461, 256
        %s463 = scalar_lea.vmem [#allocation3], %s462
        // Predicated region
        $region73: #{tpu_custom_call.1} parent=71 // pred_check
          %p464 = pneg %p53
        $region74: #{tpu_custom_call.1} parent=71 // pred_check_branch
          %466 = sbr.rel (%p464) target = $region76
        $region75: #{tpu_custom_call.1} parent=71 // pred_region
          %468 = dma.done %s460, 4096
        $region76: #{tpu_custom_call.1} parent=71 // pred_fallthru
          _
        // Predicated region
        $region77: #{tpu_custom_call.1} parent=71 // pred_check
          %p469 = pneg %p74
        $region78: #{tpu_custom_call.1} parent=71 // pred_check_branch
          %471 = sbr.rel (%p469) target = $region80
        $region79: #{tpu_custom_call.1} parent=71 // pred_region
          %473 = dma.done [#allocation7], 2048
        $region80: #{tpu_custom_call.1} parent=71 // pred_fallthru
          _
        // Predicated region
        $region81: #{tpu_custom_call.1} parent=71 // pred_check
          %p474 = pneg %p137
        $region82: #{tpu_custom_call.1} parent=71 // pred_check_branch
          %476 = sbr.rel (%p474) target = $region84
        $region83: #{tpu_custom_call.1} parent=71 // pred_region
          %478 = dma.done [#allocation7], 18432
        $region84: #{tpu_custom_call.1} parent=71 // pred_fallthru
          _
        // Predicated region
        $region85: #{tpu_custom_call.1} parent=71 // pred_check
          %p479 = pneg %p200
        $region86: #{tpu_custom_call.1} parent=71 // pred_check_branch
          %481 = sbr.rel (%p479) target = $region88
        $region87: #{tpu_custom_call.1} parent=71 // pred_region
          %483 = dma.done [#allocation10], 2048
        $region88: #{tpu_custom_call.1} parent=71 // pred_fallthru
          _
        // Predicated region
        $region89: #{tpu_custom_call.1} parent=71 // pred_check
          %p484 = pneg %p263
        $region90: #{tpu_custom_call.1} parent=71 // pred_check_branch
          %486 = sbr.rel (%p484) target = $region92
        $region91: #{tpu_custom_call.1} parent=71 // pred_region
          %488 = dma.done [#allocation10], 2048
        $region92: #{tpu_custom_call.1} parent=71 // pred_fallthru
          _
        %s489 = sand.u32 %s40, 1
        %s490 = scalar_lea.sflag [#allocation4], %s489
        %s491 = sand.u32 %s40, 1
        %s492 = smul.addr %s491, 256
        %s493 = scalar_lea.vmem [#allocation3], %s492
        %p494 = pneg %p53
        %p495 = pneg %p50
        %p496 = pneg %p74
        %p497 = pneg %p71
        %p498 = pneg %p95
        %p499 = pneg %p92
        %p500 = pneg %p116
        %p501 = pneg %p113
        %p502 = pneg %p137
        %p503 = pneg %p134
        %p504 = pneg %p158
        %p505 = pneg %p155
        %p506 = pneg %p179
        %p507 = pneg %p176
        %p508 = pneg %p200
        %p509 = pneg %p197
        %p510 = pneg %p221
        %p511 = pneg %p218
        %p512 = pneg %p242
        %p513 = pneg %p239
        %p514 = pneg %p263
        %p515 = pneg %p260
        %p516 = pneg %p284
        %p517 = pneg %p281
        %p518 = pneg %p305
        %p519 = pneg %p302
        %p520 = pneg %p331
        %p521 = pneg %p328
        %s522 = sand.u32 %s318, 1
        %s523 = scalar_lea.sflag [#allocation5], %s522
        %s524 = sand.u32 %s318, 1
        %s525 = smul.addr %s524, 64
        %s526 = scalar_lea.vmem [#allocation12], %s525
        %v527 = vld [vmem:[%s463] sm:$0xff]
        %v528 = vld [vmem:[%s463 + $0x8] sm:$0xff]
        %v529 = vld [vmem:[%s463 + $0x10] sm:$0xff]
        %v530 = vld [vmem:[%s463 + $0x18] sm:$0xff]
        %v531 = vld [vmem:[%s463 + $0x20] sm:$0xff]
        %v532 = vld [vmem:[%s463 + $0x28] sm:$0xff]
        %v533 = vld [vmem:[%s463 + $0x30] sm:$0xff]
        %v534 = vld [vmem:[%s463 + $0x38] sm:$0xff]
        %v535 = vld [vmem:[%s463 + $0x40] sm:$0xff]
        %v536 = vld [vmem:[%s463 + $0x48] sm:$0xff]
        %v537 = vld [vmem:[%s463 + $0x50] sm:$0xff]
        %v538 = vld [vmem:[%s463 + $0x58] sm:$0xff]
        %v539 = vld [vmem:[%s463 + $0x60] sm:$0xff]
        %v540 = vld [vmem:[%s463 + $0x68] sm:$0xff]
        %v541 = vld [vmem:[%s463 + $0x70] sm:$0xff]
        %v542 = vld [vmem:[%s463 + $0x78] sm:$0xff]
        %v543 = vld [vmem:[%s463 + $0x80] sm:$0xff]
        %v544 = vld [vmem:[%s463 + $0x88] sm:$0xff]
        %v545 = vld [vmem:[%s463 + $0x90] sm:$0xff]
        %v546 = vld [vmem:[%s463 + $0x98] sm:$0xff]
        %v547 = vld [vmem:[%s463 + $0xa0] sm:$0xff]
        %v548 = vld [vmem:[%s463 + $0xa8] sm:$0xff]
        %v549 = vld [vmem:[%s463 + $0xb0] sm:$0xff]
        %v550 = vld [vmem:[%s463 + $0xb8] sm:$0xff]
        %v551 = vld [vmem:[%s463 + $0xc0] sm:$0xff]
        %v552 = vld [vmem:[%s463 + $0xc8] sm:$0xff]
        %v553 = vld [vmem:[%s463 + $0xd0] sm:$0xff]
        %v554 = vld [vmem:[%s463 + $0xd8] sm:$0xff]
        %v555 = vld [vmem:[%s463 + $0xe0] sm:$0xff]
        %v556 = vld [vmem:[%s463 + $0xe8] sm:$0xff]
        %v557 = vld [vmem:[%s463 + $0xf0] sm:$0xff]
        %v558 = vld [vmem:[%s463 + $0xf8] sm:$0xff]
        %v559 = vld [vmem:[#allocation6] sm:$0xff]
        %v560 = vld [vmem:[#allocation6 + $0x8] sm:$0xff]
        %v561 = vld [vmem:[#allocation6 + $0x10] sm:$0xff]
        %v562 = vld [vmem:[#allocation6 + $0x18] sm:$0xff]
        %v563 = vld [vmem:[#allocation6 + $0x20] sm:$0xff]
        %v564 = vld [vmem:[#allocation6 + $0x28] sm:$0xff]
        %v565 = vld [vmem:[#allocation6 + $0x30] sm:$0xff]
        %v566 = vld [vmem:[#allocation6 + $0x38] sm:$0xff]
        %v567 = vld [vmem:[#allocation6 + $0x40] sm:$0xff]
        %v568 = vld [vmem:[#allocation6 + $0x48] sm:$0xff]
        %v569 = vld [vmem:[#allocation6 + $0x50] sm:$0xff]
        %v570 = vld [vmem:[#allocation6 + $0x58] sm:$0xff]
        %v571 = vld [vmem:[#allocation6 + $0x60] sm:$0xff]
        %v572 = vld [vmem:[#allocation6 + $0x68] sm:$0xff]
        %v573 = vld [vmem:[#allocation6 + $0x70] sm:$0xff]
        %v574 = vld [vmem:[#allocation6 + $0x78] sm:$0xff]
        %575 = vmatpush.msra.mxu0 %v574
        %576 = vmatpush.msra.mxu0 %v573
        %577 = vmatpush.msra.mxu0 %v572
        %578 = vmatpush.msra.mxu0 %v571
        %579 = vmatpush.msra.mxu0 %v570
        %580 = vmatpush.msra.mxu0 %v569
        %581 = vmatpush.msra.mxu0 %v568
        %582 = vmatpush.msra.mxu0 %v567
        %583 = vmatpush.msra.mxu0 %v566
        %584 = vmatpush.msra.mxu0 %v565
        %585 = vmatpush.msra.mxu0 %v564
        %586 = vmatpush.msra.mxu0 %v563
        %587 = vmatpush.msra.mxu0 %v562
        %588 = vmatpush.msra.mxu0 %v561
        %589 = vmatpush.msra.mxu0 %v560
        %590 = vmatpush.msra.mxu0 %v559
        %591 = vmatmul.f32.gmra.mxu0 %v527
        %v592 = vpop.f32.mrf.mxu0
        %v593 = vadd.f32 0.0, %v592
        %594 = vmatmul.f32.gmra.mxu0 %v528
        %v595 = vpop.f32.mrf.mxu0
        %v596 = vadd.f32 0.0, %v595
        %597 = vmatmul.f32.gmra.mxu0 %v529
        %v598 = vpop.f32.mrf.mxu0
        %v599 = vadd.f32 0.0, %v598
        %600 = vmatmul.f32.gmra.mxu0 %v530
        %v601 = vpop.f32.mrf.mxu0
        %v602 = vadd.f32 0.0, %v601
        %603 = vmatmul.f32.gmra.mxu0 %v531
        %v604 = vpop.f32.mrf.mxu0
        %v605 = vadd.f32 0.0, %v604
        %606 = vmatmul.f32.gmra.mxu0 %v532
        %v607 = vpop.f32.mrf.mxu0
        %v608 = vadd.f32 0.0, %v607
        %609 = vmatmul.f32.gmra.mxu0 %v533
        %v610 = vpop.f32.mrf.mxu0
        %v611 = vadd.f32 0.0, %v610
        %612 = vmatmul.f32.gmra.mxu0 %v534
        %v613 = vpop.f32.mrf.mxu0
        %v614 = vadd.f32 0.0, %v613
        %615 = vmatmul.f32.gmra.mxu0 %v535
        %v616 = vpop.f32.mrf.mxu0
        %v617 = vadd.f32 0.0, %v616
        %618 = vmatmul.f32.gmra.mxu0 %v536
        %v619 = vpop.f32.mrf.mxu0
        %v620 = vadd.f32 0.0, %v619
        %621 = vmatmul.f32.gmra.mxu0 %v537
        %v622 = vpop.f32.mrf.mxu0
        %v623 = vadd.f32 0.0, %v622
        %624 = vmatmul.f32.gmra.mxu0 %v538
        %v625 = vpop.f32.mrf.mxu0
        %v626 = vadd.f32 0.0, %v625
        %627 = vmatmul.f32.gmra.mxu0 %v539
        %v628 = vpop.f32.mrf.mxu0
        %v629 = vadd.f32 0.0, %v628
        %630 = vmatmul.f32.gmra.mxu0 %v540
        %v631 = vpop.f32.mrf.mxu0
        %v632 = vadd.f32 0.0, %v631
        %633 = vmatmul.f32.gmra.mxu0 %v541
        %v634 = vpop.f32.mrf.mxu0
        %v635 = vadd.f32 0.0, %v634
        %636 = vmatmul.f32.gmra.mxu0 %v542
        %v637 = vpop.f32.mrf.mxu0
        %v638 = vadd.f32 0.0, %v637
        %639 = vmatmul.f32.gmra.mxu0 %v543
        %v640 = vpop.f32.mrf.mxu0
        %v641 = vadd.f32 0.0, %v640
        %642 = vmatmul.f32.gmra.mxu0 %v544
        %v643 = vpop.f32.mrf.mxu0
        %v644 = vadd.f32 0.0, %v643
        %645 = vmatmul.f32.gmra.mxu0 %v545
        %v646 = vpop.f32.mrf.mxu0
        %v647 = vadd.f32 0.0, %v646
        %648 = vmatmul.f32.gmra.mxu0 %v546
        %v649 = vpop.f32.mrf.mxu0
        %v650 = vadd.f32 0.0, %v649
        %651 = vmatmul.f32.gmra.mxu0 %v547
        %v652 = vpop.f32.mrf.mxu0
        %v653 = vadd.f32 0.0, %v652
        %654 = vmatmul.f32.gmra.mxu0 %v548
        %v655 = vpop.f32.mrf.mxu0
        %v656 = vadd.f32 0.0, %v655
        %657 = vmatmul.f32.gmra.mxu0 %v549
        %v658 = vpop.f32.mrf.mxu0
        %v659 = vadd.f32 0.0, %v658
        %660 = vmatmul.f32.gmra.mxu0 %v550
        %v661 = vpop.f32.mrf.mxu0
        %v662 = vadd.f32 0.0, %v661
        %663 = vmatmul.f32.gmra.mxu0 %v551
        %v664 = vpop.f32.mrf.mxu0
        %v665 = vadd.f32 0.0, %v664
        %666 = vmatmul.f32.gmra.mxu0 %v552
        %v667 = vpop.f32.mrf.mxu0
        %v668 = vadd.f32 0.0, %v667
        %669 = vmatmul.f32.gmra.mxu0 %v553
        %v670 = vpop.f32.mrf.mxu0
        %v671 = vadd.f32 0.0, %v670
        %672 = vmatmul.f32.gmra.mxu0 %v554
        %v673 = vpop.f32.mrf.mxu0
        %v674 = vadd.f32 0.0, %v673
        %675 = vmatmul.f32.gmra.mxu0 %v555
        %v676 = vpop.f32.mrf.mxu0
        %v677 = vadd.f32 0.0, %v676
        %678 = vmatmul.f32.gmra.mxu0 %v556
        %v679 = vpop.f32.mrf.mxu0
        %v680 = vadd.f32 0.0, %v679
        %681 = vmatmul.f32.gmra.mxu0 %v557
        %v682 = vpop.f32.mrf.mxu0
        %v683 = vadd.f32 0.0, %v682
        %684 = vmatmul.f32.gmra.mxu0 %v558
        %v685 = vpop.f32.mrf.mxu0
        %v686 = vadd.f32 0.0, %v685
        %687 = vdwg.mxu0
        %v688 = vld [vmem:[%s2] sm:$0x1]
        %v690 = vperm.slane %v688, 0
        %v692 = vmul.f32 %v593, %v690
        %v693 = vmul.f32 %v596, %v690
        %v694 = vmul.f32 %v599, %v690
        %v695 = vmul.f32 %v602, %v690
        %v696 = vmul.f32 %v605, %v690
        %v697 = vmul.f32 %v608, %v690
        %v698 = vmul.f32 %v611, %v690
        %v699 = vmul.f32 %v614, %v690
        %v700 = vmul.f32 %v617, %v690
        %v701 = vmul.f32 %v620, %v690
        %v702 = vmul.f32 %v623, %v690
        %v703 = vmul.f32 %v626, %v690
        %v704 = vmul.f32 %v629, %v690
        %v705 = vmul.f32 %v632, %v690
        %v706 = vmul.f32 %v635, %v690
        %v707 = vmul.f32 %v638, %v690
        %v708 = vmul.f32 %v641, %v690
        %v709 = vmul.f32 %v644, %v690
        %v710 = vmul.f32 %v647, %v690
        %v711 = vmul.f32 %v650, %v690
        %v712 = vmul.f32 %v653, %v690
        %v713 = vmul.f32 %v656, %v690
        %v714 = vmul.f32 %v659, %v690
        %v715 = vmul.f32 %v662, %v690
        %v716 = vmul.f32 %v665, %v690
        %v717 = vmul.f32 %v668, %v690
        %v718 = vmul.f32 %v671, %v690
        %v719 = vmul.f32 %v674, %v690
        %v720 = vmul.f32 %v677, %v690
        %v721 = vmul.f32 %v680, %v690
        %v722 = vmul.f32 %v683, %v690
        %v723 = vmul.f32 %v686, %v690
        %v724 = vld [vmem:[%s3] sm:$0x1]
        %v726 = vperm.slane %v724, 0
        %v728 = vadd.f32 %v692, %v726
        %v729 = vadd.f32 %v693, %v726
        %v730 = vadd.f32 %v694, %v726
        %v731 = vadd.f32 %v695, %v726
        %v732 = vadd.f32 %v696, %v726
        %v733 = vadd.f32 %v697, %v726
        %v734 = vadd.f32 %v698, %v726
        %v735 = vadd.f32 %v699, %v726
        %v736 = vadd.f32 %v700, %v726
        %v737 = vadd.f32 %v701, %v726
        %v738 = vadd.f32 %v702, %v726
        %v739 = vadd.f32 %v703, %v726
        %v740 = vadd.f32 %v704, %v726
        %v741 = vadd.f32 %v705, %v726
        %v742 = vadd.f32 %v706, %v726
        %v743 = vadd.f32 %v707, %v726
        %v744 = vadd.f32 %v708, %v726
        %v745 = vadd.f32 %v709, %v726
        %v746 = vadd.f32 %v710, %v726
        %v747 = vadd.f32 %v711, %v726
        %v748 = vadd.f32 %v712, %v726
        %v749 = vadd.f32 %v713, %v726
        %v750 = vadd.f32 %v714, %v726
        %v751 = vadd.f32 %v715, %v726
        %v752 = vadd.f32 %v716, %v726
        %v753 = vadd.f32 %v717, %v726
        %v754 = vadd.f32 %v718, %v726
        %v755 = vadd.f32 %v719, %v726
        %v756 = vadd.f32 %v720, %v726
        %v757 = vadd.f32 %v721, %v726
        %v758 = vadd.f32 %v722, %v726
        %v759 = vadd.f32 %v723, %v726
        %v760 = vmax.f32 %v728, 0.0
        %v761 = vmax.f32 %v729, 0.0
        %v762 = vmax.f32 %v730, 0.0
        %v763 = vmax.f32 %v731, 0.0
        %v764 = vmax.f32 %v732, 0.0
        %v765 = vmax.f32 %v733, 0.0
        %v766 = vmax.f32 %v734, 0.0
        %v767 = vmax.f32 %v735, 0.0
        %v768 = vmax.f32 %v736, 0.0
        %v769 = vmax.f32 %v737, 0.0
        %v770 = vmax.f32 %v738, 0.0
        %v771 = vmax.f32 %v739, 0.0
        %v772 = vmax.f32 %v740, 0.0
        %v773 = vmax.f32 %v741, 0.0
        %v774 = vmax.f32 %v742, 0.0
        %v775 = vmax.f32 %v743, 0.0
        %v776 = vmax.f32 %v744, 0.0
        %v777 = vmax.f32 %v745, 0.0
        %v778 = vmax.f32 %v746, 0.0
        %v779 = vmax.f32 %v747, 0.0
        %v780 = vmax.f32 %v748, 0.0
        %v781 = vmax.f32 %v749, 0.0
        %v782 = vmax.f32 %v750, 0.0
        %v783 = vmax.f32 %v751, 0.0
        %v784 = vmax.f32 %v752, 0.0
        %v785 = vmax.f32 %v753, 0.0
        %v786 = vmax.f32 %v754, 0.0
        %v787 = vmax.f32 %v755, 0.0
        %v788 = vmax.f32 %v756, 0.0
        %v789 = vmax.f32 %v757, 0.0
        %v790 = vmax.f32 %v758, 0.0
        %v791 = vmax.f32 %v759, 0.0
        %792 = vst [vmem:[#allocation2] sm:$0xff] 0.0
        %793 = vst [vmem:[#allocation2 + $0x8] sm:$0x1] 0.0
        %794 = vst [vmem:[#allocation2 + $0x90] sm:$0xff] 0.0
        %795 = vst [vmem:[#allocation2 + $0x98] sm:$0x1] 0.0
        %s796 = scalar_lea.vmem [#allocation2], 416
        %797 = vst [vmem:[%s796] sm:$0xff] 0.0
        %798 = vst [vmem:[%s796 + $0x8] sm:$0x1] 0.0
        %799 = vst [vmem:[%s796 + $0x90] sm:$0xff] 0.0
        %800 = vst [vmem:[%s796 + $0x98] sm:$0x1] 0.0
        %801 = vst [vmem:[#allocation2] sm:$0x1] 0.0
        %802 = vst [vmem:[#allocation2 + $0x10] sm:$0x1] 0.0
        %803 = vst [vmem:[#allocation2 + $0x20] sm:$0x1] 0.0
        %804 = vst [vmem:[#allocation2 + $0x30] sm:$0x1] 0.0
        %805 = vst [vmem:[#allocation2 + $0x40] sm:$0x1] 0.0
        %806 = vst [vmem:[#allocation2 + $0x50] sm:$0x1] 0.0
        %807 = vst [vmem:[#allocation2 + $0x60] sm:$0x1] 0.0
        %808 = vst [vmem:[#allocation2 + $0x70] sm:$0x1] 0.0
        %809 = vst [vmem:[#allocation2 + $0x80] sm:$0x1] 0.0
        %810 = vst [vmem:[#allocation2 + $0x120] sm:$0x1] 0.0
        %811 = vst [vmem:[#allocation2 + $0x130] sm:$0x1] 0.0
        %812 = vst [vmem:[#allocation2 + $0x140] sm:$0x1] 0.0
        %813 = vst [vmem:[#allocation2 + $0x150] sm:$0x1] 0.0
        %814 = vst [vmem:[#allocation2 + $0x160] sm:$0x1] 0.0
        %815 = vst [vmem:[#allocation2 + $0x170] sm:$0x1] 0.0
        %816 = vst [vmem:[#allocation2 + $0x180] sm:$0x1] 0.0
        %817 = vst [vmem:[#allocation2 + $0x190] sm:$0x1] 0.0
        %818 = vst [vmem:[#allocation2 + $0x1a0] sm:$0x1] 0.0
        %s819 = scalar_lea.vmem [#allocation2], 144
        %820 = vst [vmem:[%s819 + $0x8] sm:$0x1] 0.0
        %821 = vst [vmem:[%s819 + $0x18] sm:$0x1] 0.0
        %822 = vst [vmem:[%s819 + $0x28] sm:$0x1] 0.0
        %823 = vst [vmem:[%s819 + $0x38] sm:$0x1] 0.0
        %824 = vst [vmem:[%s819 + $0x48] sm:$0x1] 0.0
        %825 = vst [vmem:[%s819 + $0x58] sm:$0x1] 0.0
        %826 = vst [vmem:[%s819 + $0x68] sm:$0x1] 0.0
        %827 = vst [vmem:[%s819 + $0x78] sm:$0x1] 0.0
        %828 = vst [vmem:[%s819 + $0x88] sm:$0x1] 0.0
        %829 = vst [vmem:[%s819 + $0x128] sm:$0x1] 0.0
        %830 = vst [vmem:[%s819 + $0x138] sm:$0x1] 0.0
        %831 = vst [vmem:[%s819 + $0x148] sm:$0x1] 0.0
        %832 = vst [vmem:[%s819 + $0x158] sm:$0x1] 0.0
        %833 = vst [vmem:[%s819 + $0x168] sm:$0x1] 0.0
        %834 = vst [vmem:[%s819 + $0x178] sm:$0x1] 0.0
        %835 = vst [vmem:[%s819 + $0x188] sm:$0x1] 0.0
        %836 = vst [vmem:[%s819 + $0x198] sm:$0x1] 0.0
        %837 = vst [vmem:[%s819 + $0x1a8] sm:$0x1] 0.0
        %s838 = scalar_lea.vmem [#allocation2], 432
        %839 = vst [vmem:[%s838] sm:$0xff] %v760
        %840 = vst [vmem:[%s838 + $0x10] sm:$0xff] %v761
        %841 = vst [vmem:[%s838 + $0x20] sm:$0xff] %v762
        %842 = vst [vmem:[%s838 + $0x30] sm:$0xff] %v763
        %843 = vst [vmem:[%s838 + $0x40] sm:$0xff] %v764
        %844 = vst [vmem:[%s838 + $0x50] sm:$0xff] %v765
        %845 = vst [vmem:[%s838 + $0x60] sm:$0xff] %v766
        %846 = vst [vmem:[%s838 + $0x70] sm:$0xff] %v767
        %s847 = scalar_lea.vmem [#allocation2], 288
        %848 = vst [vmem:[%s847 + $0x1] sm:$0xff] %v768
        %849 = vst [vmem:[%s847 + $0x11] sm:$0xff] %v769
        %850 = vst [vmem:[%s847 + $0x21] sm:$0xff] %v770
        %851 = vst [vmem:[%s847 + $0x31] sm:$0xff] %v771
        %852 = vst [vmem:[%s847 + $0x41] sm:$0xff] %v772
        %853 = vst [vmem:[%s847 + $0x51] sm:$0xff] %v773
        %854 = vst [vmem:[%s847 + $0x61] sm:$0xff] %v774
        %855 = vst [vmem:[%s847 + $0x71] sm:$0xff] %v775
        %s856 = scalar_lea.vmem [#allocation2], 160
        %857 = vst [vmem:[%s856] sm:$0xff] %v776
        %858 = vst [vmem:[%s856 + $0x10] sm:$0xff] %v777
        %859 = vst [vmem:[%s856 + $0x20] sm:$0xff] %v778
        %860 = vst [vmem:[%s856 + $0x30] sm:$0xff] %v779
        %861 = vst [vmem:[%s856 + $0x40] sm:$0xff] %v780
        %862 = vst [vmem:[%s856 + $0x50] sm:$0xff] %v781
        %863 = vst [vmem:[%s856 + $0x60] sm:$0xff] %v782
        %864 = vst [vmem:[%s856 + $0x70] sm:$0xff] %v783
        %s865 = scalar_lea.vmem [#allocation2], 16
        %866 = vst [vmem:[%s865 + $0x1] sm:$0xff] %v784
        %867 = vst [vmem:[%s865 + $0x11] sm:$0xff] %v785
        %868 = vst [vmem:[%s865 + $0x21] sm:$0xff] %v786
        %869 = vst [vmem:[%s865 + $0x31] sm:$0xff] %v787
        %870 = vst [vmem:[%s865 + $0x41] sm:$0xff] %v788
        %871 = vst [vmem:[%s865 + $0x51] sm:$0xff] %v789
        %872 = vst [vmem:[%s865 + $0x61] sm:$0xff] %v790
        %873 = vst [vmem:[%s865 + $0x71] sm:$0xff] %v791
        %v874 = vld [vmem:[#allocation2] sm:$0xff]
        %v875 = vld [vmem:[#allocation2 + $0x10] sm:$0xff]
        %v876 = vld [vmem:[#allocation2 + $0x20] sm:$0xff]
        %v877 = vld [vmem:[#allocation2 + $0x30] sm:$0xff]
        %v878 = vld [vmem:[#allocation2 + $0x40] sm:$0xff]
        %v879 = vld [vmem:[#allocation2 + $0x50] sm:$0xff]
        %v880 = vld [vmem:[#allocation2 + $0x60] sm:$0xff]
        %v881 = vld [vmem:[#allocation2 + $0x70] sm:$0xff]
        %v882 = vld [vmem:[#allocation8] sm:$0xff]
        %v883 = vld [vmem:[#allocation8 + $0x8] sm:$0xff]
        %v884 = vld [vmem:[#allocation8 + $0x10] sm:$0xff]
        %v885 = vld [vmem:[#allocation8 + $0x18] sm:$0xff]
        %v886 = vld [vmem:[#allocation8 + $0x20] sm:$0xff]
        %v887 = vld [vmem:[#allocation8 + $0x28] sm:$0xff]
        %v888 = vld [vmem:[#allocation8 + $0x30] sm:$0xff]
        %v889 = vld [vmem:[#allocation8 + $0x38] sm:$0xff]
        %v890 = vld [vmem:[#allocation8 + $0x40] sm:$0xff]
        %v891 = vld [vmem:[#allocation8 + $0x48] sm:$0xff]
        %v892 = vld [vmem:[#allocation8 + $0x50] sm:$0xff]
        %v893 = vld [vmem:[#allocation8 + $0x58] sm:$0xff]
        %v894 = vld [vmem:[#allocation8 + $0x60] sm:$0xff]
        %v895 = vld [vmem:[#allocation8 + $0x68] sm:$0xff]
        %v896 = vld [vmem:[#allocation8 + $0x70] sm:$0xff]
        %v897 = vld [vmem:[#allocation8 + $0x78] sm:$0xff]
        %v898 = vld [vmem:[%s819] sm:$0xff]
        %v899 = vld [vmem:[%s819 + $0x10] sm:$0xff]
        %v900 = vld [vmem:[%s819 + $0x20] sm:$0xff]
        %v901 = vld [vmem:[%s819 + $0x30] sm:$0xff]
        %v902 = vld [vmem:[%s819 + $0x40] sm:$0xff]
        %v903 = vld [vmem:[%s819 + $0x50] sm:$0xff]
        %v904 = vld [vmem:[%s819 + $0x60] sm:$0xff]
        %v905 = vld [vmem:[%s819 + $0x70] sm:$0xff]
        %s906 = scalar_lea.vmem [#allocation8], 128
        %v907 = vld [vmem:[%s906] sm:$0xff]
        %v908 = vld [vmem:[%s906 + $0x8] sm:$0xff]
        %v909 = vld [vmem:[%s906 + $0x10] sm:$0xff]
        %v910 = vld [vmem:[%s906 + $0x18] sm:$0xff]
        %v911 = vld [vmem:[%s906 + $0x20] sm:$0xff]
        %v912 = vld [vmem:[%s906 + $0x28] sm:$0xff]
        %v913 = vld [vmem:[%s906 + $0x30] sm:$0xff]
        %v914 = vld [vmem:[%s906 + $0x38] sm:$0xff]
        %v915 = vld [vmem:[%s906 + $0x40] sm:$0xff]
        %v916 = vld [vmem:[%s906 + $0x48] sm:$0xff]
        %v917 = vld [vmem:[%s906 + $0x50] sm:$0xff]
        %v918 = vld [vmem:[%s906 + $0x58] sm:$0xff]
        %v919 = vld [vmem:[%s906 + $0x60] sm:$0xff]
        %v920 = vld [vmem:[%s906 + $0x68] sm:$0xff]
        %v921 = vld [vmem:[%s906 + $0x70] sm:$0xff]
        %v922 = vld [vmem:[%s906 + $0x78] sm:$0xff]
        %923 = vmatpush.msra.mxu0 %v922
        %924 = vmatpush.msra.mxu0 %v921
        %925 = vmatpush.msra.mxu0 %v920
        %926 = vmatpush.msra.mxu0 %v919
        %927 = vmatpush.msra.mxu0 %v918
        %928 = vmatpush.msra.mxu0 %v917
        %929 = vmatpush.msra.mxu0 %v916
        %930 = vmatpush.msra.mxu0 %v915
        %931 = vmatpush.msra.mxu0 %v914
        %932 = vmatpush.msra.mxu0 %v913
        %933 = vmatpush.msra.mxu0 %v912
        %934 = vmatpush.msra.mxu0 %v911
        %935 = vmatpush.msra.mxu0 %v910
        %936 = vmatpush.msra.mxu0 %v909
        %937 = vmatpush.msra.mxu0 %v908
        %938 = vmatpush.msra.mxu0 %v907
        %939 = vmatmul.f32.gmra.mxu0 %v898
        %v940 = vpop.f32.mrf.mxu0
        %v941 = vadd.f32 0.0, %v940
        %942 = vmatmul.f32.gmra.mxu0 %v899
        %v943 = vpop.f32.mrf.mxu0
        %v944 = vadd.f32 0.0, %v943
        %945 = vmatmul.f32.gmra.mxu0 %v900
        %v946 = vpop.f32.mrf.mxu0
        %v947 = vadd.f32 0.0, %v946
        %948 = vmatmul.f32.gmra.mxu0 %v901
        %v949 = vpop.f32.mrf.mxu0
        %v950 = vadd.f32 0.0, %v949
        %951 = vmatmul.f32.gmra.mxu0 %v902
        %v952 = vpop.f32.mrf.mxu0
        %v953 = vadd.f32 0.0, %v952
        %954 = vmatmul.f32.gmra.mxu0 %v903
        %v955 = vpop.f32.mrf.mxu0
        %v956 = vadd.f32 0.0, %v955
        %957 = vmatmul.f32.gmra.mxu0 %v904
        %v958 = vpop.f32.mrf.mxu0
        %v959 = vadd.f32 0.0, %v958
        %960 = vmatmul.f32.gmra.mxu0 %v905
        %v961 = vpop.f32.mrf.mxu0
        %v962 = vadd.f32 0.0, %v961
        %963 = vdwg.mxu0
        %964 = vmatpush.msra.mxu0 %v897
        %965 = vmatpush.msra.mxu0 %v896
        %966 = vmatpush.msra.mxu0 %v895
        %967 = vmatpush.msra.mxu0 %v894
        %968 = vmatpush.msra.mxu0 %v893
        %969 = vmatpush.msra.mxu0 %v892
        %970 = vmatpush.msra.mxu0 %v891
        %971 = vmatpush.msra.mxu0 %v890
        %972 = vmatpush.msra.mxu0 %v889
        %973 = vmatpush.msra.mxu0 %v888
        %974 = vmatpush.msra.mxu0 %v887
        %975 = vmatpush.msra.mxu0 %v886
        %976 = vmatpush.msra.mxu0 %v885
        %977 = vmatpush.msra.mxu0 %v884
        %978 = vmatpush.msra.mxu0 %v883
        %979 = vmatpush.msra.mxu0 %v882
        %980 = vmatmul.f32.gmra.mxu0 %v874
        %v981 = vpop.f32.mrf.mxu0
        %v982 = vadd.f32 %v941, %v981
        %983 = vmatmul.f32.gmra.mxu0 %v875
        %v984 = vpop.f32.mrf.mxu0
        %v985 = vadd.f32 %v944, %v984
        %986 = vmatmul.f32.gmra.mxu0 %v876
        %v987 = vpop.f32.mrf.mxu0
        %v988 = vadd.f32 %v947, %v987
        %989 = vmatmul.f32.gmra.mxu0 %v877
        %v990 = vpop.f32.mrf.mxu0
        %v991 = vadd.f32 %v950, %v990
        %992 = vmatmul.f32.gmra.mxu0 %v878
        %v993 = vpop.f32.mrf.mxu0
        %v994 = vadd.f32 %v953, %v993
        %995 = vmatmul.f32.gmra.mxu0 %v879
        %v996 = vpop.f32.mrf.mxu0
        %v997 = vadd.f32 %v956, %v996
        %998 = vmatmul.f32.gmra.mxu0 %v880
        %v999 = vpop.f32.mrf.mxu0
        %v1000 = vadd.f32 %v959, %v999
        %1001 = vmatmul.f32.gmra.mxu0 %v881
        %v1002 = vpop.f32.mrf.mxu0
        %v1003 = vadd.f32 %v962, %v1002
        %1004 = vdwg.mxu0
        %v1005 = vld [vmem:[#allocation2 + $0x1] sm:$0xff]
        %v1006 = vld [vmem:[#allocation2 + $0x11] sm:$0xff]
        %v1007 = vld [vmem:[#allocation2 + $0x21] sm:$0xff]
        %v1008 = vld [vmem:[#allocation2 + $0x31] sm:$0xff]
        %v1009 = vld [vmem:[#allocation2 + $0x41] sm:$0xff]
        %v1010 = vld [vmem:[#allocation2 + $0x51] sm:$0xff]
        %v1011 = vld [vmem:[#allocation2 + $0x61] sm:$0xff]
        %v1012 = vld [vmem:[#allocation2 + $0x71] sm:$0xff]
        %s1013 = scalar_lea.vmem [#allocation8], 256
        %v1014 = vld [vmem:[%s1013] sm:$0xff]
        %v1015 = vld [vmem:[%s1013 + $0x8] sm:$0xff]
        %v1016 = vld [vmem:[%s1013 + $0x10] sm:$0xff]
        %v1017 = vld [vmem:[%s1013 + $0x18] sm:$0xff]
        %v1018 = vld [vmem:[%s1013 + $0x20] sm:$0xff]
        %v1019 = vld [vmem:[%s1013 + $0x28] sm:$0xff]
        %v1020 = vld [vmem:[%s1013 + $0x30] sm:$0xff]
        %v1021 = vld [vmem:[%s1013 + $0x38] sm:$0xff]
        %v1022 = vld [vmem:[%s1013 + $0x40] sm:$0xff]
        %v1023 = vld [vmem:[%s1013 + $0x48] sm:$0xff]
        %v1024 = vld [vmem:[%s1013 + $0x50] sm:$0xff]
        %v1025 = vld [vmem:[%s1013 + $0x58] sm:$0xff]
        %v1026 = vld [vmem:[%s1013 + $0x60] sm:$0xff]
        %v1027 = vld [vmem:[%s1013 + $0x68] sm:$0xff]
        %v1028 = vld [vmem:[%s1013 + $0x70] sm:$0xff]
        %v1029 = vld [vmem:[%s1013 + $0x78] sm:$0xff]
        %1030 = vmatpush.msra.mxu0 %v1029
        %1031 = vmatpush.msra.mxu0 %v1028
        %1032 = vmatpush.msra.mxu0 %v1027
        %1033 = vmatpush.msra.mxu0 %v1026
        %1034 = vmatpush.msra.mxu0 %v1025
        %1035 = vmatpush.msra.mxu0 %v1024
        %1036 = vmatpush.msra.mxu0 %v1023
        %1037 = vmatpush.msra.mxu0 %v1022
        %1038 = vmatpush.msra.mxu0 %v1021
        %1039 = vmatpush.msra.mxu0 %v1020
        %1040 = vmatpush.msra.mxu0 %v1019
        %1041 = vmatpush.msra.mxu0 %v1018
        %1042 = vmatpush.msra.mxu0 %v1017
        %1043 = vmatpush.msra.mxu0 %v1016
        %1044 = vmatpush.msra.mxu0 %v1015
        %1045 = vmatpush.msra.mxu0 %v1014
        %1046 = vmatmul.f32.gmra.mxu0 %v1005
        %v1047 = vpop.f32.mrf.mxu0
        %v1048 = vadd.f32 0.0, %v1047
        %1049 = vmatmul.f32.gmra.mxu0 %v1006
        %v1050 = vpop.f32.mrf.mxu0
        %v1051 = vadd.f32 0.0, %v1050
        %1052 = vmatmul.f32.gmra.mxu0 %v1007
        %v1053 = vpop.f32.mrf.mxu0
        %v1054 = vadd.f32 0.0, %v1053
        %1055 = vmatmul.f32.gmra.mxu0 %v1008
        %v1056 = vpop.f32.mrf.mxu0
        %v1057 = vadd.f32 0.0, %v1056
        %1058 = vmatmul.f32.gmra.mxu0 %v1009
        %v1059 = vpop.f32.mrf.mxu0
        %v1060 = vadd.f32 0.0, %v1059
        %1061 = vmatmul.f32.gmra.mxu0 %v1010
        %v1062 = vpop.f32.mrf.mxu0
        %v1063 = vadd.f32 0.0, %v1062
        %1064 = vmatmul.f32.gmra.mxu0 %v1011
        %v1065 = vpop.f32.mrf.mxu0
        %v1066 = vadd.f32 0.0, %v1065
        %1067 = vmatmul.f32.gmra.mxu0 %v1012
        %v1068 = vpop.f32.mrf.mxu0
        %v1069 = vadd.f32 0.0, %v1068
        %1070 = vdwg.mxu0
        %v1071 = vadd.f32 %v982, %v1048
        %v1072 = vadd.f32 %v985, %v1051
        %v1073 = vadd.f32 %v988, %v1054
        %v1074 = vadd.f32 %v991, %v1057
        %v1075 = vadd.f32 %v994, %v1060
        %v1076 = vadd.f32 %v997, %v1063
        %v1077 = vadd.f32 %v1000, %v1066
        %v1078 = vadd.f32 %v1003, %v1069
        %v1079 = vld [vmem:[%s847] sm:$0xff]
        %v1080 = vld [vmem:[%s847 + $0x10] sm:$0xff]
        %v1081 = vld [vmem:[%s847 + $0x20] sm:$0xff]
        %v1082 = vld [vmem:[%s847 + $0x30] sm:$0xff]
        %v1083 = vld [vmem:[%s847 + $0x40] sm:$0xff]
        %v1084 = vld [vmem:[%s847 + $0x50] sm:$0xff]
        %v1085 = vld [vmem:[%s847 + $0x60] sm:$0xff]
        %v1086 = vld [vmem:[%s847 + $0x70] sm:$0xff]
        %s1087 = scalar_lea.vmem [#allocation8], 384
        %v1088 = vld [vmem:[%s1087] sm:$0xff]
        %v1089 = vld [vmem:[%s1087 + $0x8] sm:$0xff]
        %v1090 = vld [vmem:[%s1087 + $0x10] sm:$0xff]
        %v1091 = vld [vmem:[%s1087 + $0x18] sm:$0xff]
        %v1092 = vld [vmem:[%s1087 + $0x20] sm:$0xff]
        %v1093 = vld [vmem:[%s1087 + $0x28] sm:$0xff]
        %v1094 = vld [vmem:[%s1087 + $0x30] sm:$0xff]
        %v1095 = vld [vmem:[%s1087 + $0x38] sm:$0xff]
        %v1096 = vld [vmem:[%s1087 + $0x40] sm:$0xff]
        %v1097 = vld [vmem:[%s1087 + $0x48] sm:$0xff]
        %v1098 = vld [vmem:[%s1087 + $0x50] sm:$0xff]
        %v1099 = vld [vmem:[%s1087 + $0x58] sm:$0xff]
        %v1100 = vld [vmem:[%s1087 + $0x60] sm:$0xff]
        %v1101 = vld [vmem:[%s1087 + $0x68] sm:$0xff]
        %v1102 = vld [vmem:[%s1087 + $0x70] sm:$0xff]
        %v1103 = vld [vmem:[%s1087 + $0x78] sm:$0xff]
        %1104 = vmatpush.msra.mxu0 %v1103
        %1105 = vmatpush.msra.mxu0 %v1102
        %1106 = vmatpush.msra.mxu0 %v1101
        %1107 = vmatpush.msra.mxu0 %v1100
        %1108 = vmatpush.msra.mxu0 %v1099
        %1109 = vmatpush.msra.mxu0 %v1098
        %1110 = vmatpush.msra.mxu0 %v1097
        %1111 = vmatpush.msra.mxu0 %v1096
        %1112 = vmatpush.msra.mxu0 %v1095
        %1113 = vmatpush.msra.mxu0 %v1094
        %1114 = vmatpush.msra.mxu0 %v1093
        %1115 = vmatpush.msra.mxu0 %v1092
        %1116 = vmatpush.msra.mxu0 %v1091
        %1117 = vmatpush.msra.mxu0 %v1090
        %1118 = vmatpush.msra.mxu0 %v1089
        %1119 = vmatpush.msra.mxu0 %v1088
        %1120 = vmatmul.f32.gmra.mxu0 %v1079
        %v1121 = vpop.f32.mrf.mxu0
        %v1122 = vadd.f32 0.0, %v1121
        %1123 = vmatmul.f32.gmra.mxu0 %v1080
        %v1124 = vpop.f32.mrf.mxu0
        %v1125 = vadd.f32 0.0, %v1124
        %1126 = vmatmul.f32.gmra.mxu0 %v1081
        %v1127 = vpop.f32.mrf.mxu0
        %v1128 = vadd.f32 0.0, %v1127
        %1129 = vmatmul.f32.gmra.mxu0 %v1082
        %v1130 = vpop.f32.mrf.mxu0
        %v1131 = vadd.f32 0.0, %v1130
        %1132 = vmatmul.f32.gmra.mxu0 %v1083
        %v1133 = vpop.f32.mrf.mxu0
        %v1134 = vadd.f32 0.0, %v1133
        %1135 = vmatmul.f32.gmra.mxu0 %v1084
        %v1136 = vpop.f32.mrf.mxu0
        %v1137 = vadd.f32 0.0, %v1136
        %1138 = vmatmul.f32.gmra.mxu0 %v1085
        %v1139 = vpop.f32.mrf.mxu0
        %v1140 = vadd.f32 0.0, %v1139
        %1141 = vmatmul.f32.gmra.mxu0 %v1086
        %v1142 = vpop.f32.mrf.mxu0
        %v1143 = vadd.f32 0.0, %v1142
        %1144 = vdwg.mxu0
        %v1145 = vadd.f32 %v1071, %v1122
        %v1146 = vadd.f32 %v1072, %v1125
        %v1147 = vadd.f32 %v1073, %v1128
        %v1148 = vadd.f32 %v1074, %v1131
        %v1149 = vadd.f32 %v1075, %v1134
        %v1150 = vadd.f32 %v1076, %v1137
        %v1151 = vadd.f32 %v1077, %v1140
        %v1152 = vadd.f32 %v1078, %v1143
        %v1153 = vld [vmem:[%s838] sm:$0xff]
        %v1154 = vld [vmem:[%s838 + $0x10] sm:$0xff]
        %v1155 = vld [vmem:[%s838 + $0x20] sm:$0xff]
        %v1156 = vld [vmem:[%s838 + $0x30] sm:$0xff]
        %v1157 = vld [vmem:[%s838 + $0x40] sm:$0xff]
        %v1158 = vld [vmem:[%s838 + $0x50] sm:$0xff]
        %v1159 = vld [vmem:[%s838 + $0x60] sm:$0xff]
        %v1160 = vld [vmem:[%s838 + $0x70] sm:$0xff]
        %s1161 = scalar_lea.vmem [#allocation8], 512
        %v1162 = vld [vmem:[%s1161] sm:$0xff]
        %v1163 = vld [vmem:[%s1161 + $0x8] sm:$0xff]
        %v1164 = vld [vmem:[%s1161 + $0x10] sm:$0xff]
        %v1165 = vld [vmem:[%s1161 + $0x18] sm:$0xff]
        %v1166 = vld [vmem:[%s1161 + $0x20] sm:$0xff]
        %v1167 = vld [vmem:[%s1161 + $0x28] sm:$0xff]
        %v1168 = vld [vmem:[%s1161 + $0x30] sm:$0xff]
        %v1169 = vld [vmem:[%s1161 + $0x38] sm:$0xff]
        %v1170 = vld [vmem:[%s1161 + $0x40] sm:$0xff]
        %v1171 = vld [vmem:[%s1161 + $0x48] sm:$0xff]
        %v1172 = vld [vmem:[%s1161 + $0x50] sm:$0xff]
        %v1173 = vld [vmem:[%s1161 + $0x58] sm:$0xff]
        %v1174 = vld [vmem:[%s1161 + $0x60] sm:$0xff]
        %v1175 = vld [vmem:[%s1161 + $0x68] sm:$0xff]
        %v1176 = vld [vmem:[%s1161 + $0x70] sm:$0xff]
        %v1177 = vld [vmem:[%s1161 + $0x78] sm:$0xff]
        %1178 = vmatpush.msra.mxu0 %v1177
        %1179 = vmatpush.msra.mxu0 %v1176
        %1180 = vmatpush.msra.mxu0 %v1175
        %1181 = vmatpush.msra.mxu0 %v1174
        %1182 = vmatpush.msra.mxu0 %v1173
        %1183 = vmatpush.msra.mxu0 %v1172
        %1184 = vmatpush.msra.mxu0 %v1171
        %1185 = vmatpush.msra.mxu0 %v1170
        %1186 = vmatpush.msra.mxu0 %v1169
        %1187 = vmatpush.msra.mxu0 %v1168
        %1188 = vmatpush.msra.mxu0 %v1167
        %1189 = vmatpush.msra.mxu0 %v1166
        %1190 = vmatpush.msra.mxu0 %v1165
        %1191 = vmatpush.msra.mxu0 %v1164
        %1192 = vmatpush.msra.mxu0 %v1163
        %1193 = vmatpush.msra.mxu0 %v1162
        %1194 = vmatmul.f32.gmra.mxu0 %v1153
        %v1195 = vpop.f32.mrf.mxu0
        %v1196 = vadd.f32 0.0, %v1195
        %1197 = vmatmul.f32.gmra.mxu0 %v1154
        %v1198 = vpop.f32.mrf.mxu0
        %v1199 = vadd.f32 0.0, %v1198
        %1200 = vmatmul.f32.gmra.mxu0 %v1155
        %v1201 = vpop.f32.mrf.mxu0
        %v1202 = vadd.f32 0.0, %v1201
        %1203 = vmatmul.f32.gmra.mxu0 %v1156
        %v1204 = vpop.f32.mrf.mxu0
        %v1205 = vadd.f32 0.0, %v1204
        %1206 = vmatmul.f32.gmra.mxu0 %v1157
        %v1207 = vpop.f32.mrf.mxu0
        %v1208 = vadd.f32 0.0, %v1207
        %1209 = vmatmul.f32.gmra.mxu0 %v1158
        %v1210 = vpop.f32.mrf.mxu0
        %v1211 = vadd.f32 0.0, %v1210
        %1212 = vmatmul.f32.gmra.mxu0 %v1159
        %v1213 = vpop.f32.mrf.mxu0
        %v1214 = vadd.f32 0.0, %v1213
        %1215 = vmatmul.f32.gmra.mxu0 %v1160
        %v1216 = vpop.f32.mrf.mxu0
        %v1217 = vadd.f32 0.0, %v1216
        %1218 = vdwg.mxu0
        %v1219 = vadd.f32 %v1145, %v1196
        %v1220 = vadd.f32 %v1146, %v1199
        %v1221 = vadd.f32 %v1147, %v1202
        %v1222 = vadd.f32 %v1148, %v1205
        %v1223 = vadd.f32 %v1149, %v1208
        %v1224 = vadd.f32 %v1150, %v1211
        %v1225 = vadd.f32 %v1151, %v1214
        %v1226 = vadd.f32 %v1152, %v1217
        %v1227 = vld [vmem:[%s847 + $0x1] sm:$0xff]
        %v1228 = vld [vmem:[%s847 + $0x11] sm:$0xff]
        %v1229 = vld [vmem:[%s847 + $0x21] sm:$0xff]
        %v1230 = vld [vmem:[%s847 + $0x31] sm:$0xff]
        %v1231 = vld [vmem:[%s847 + $0x41] sm:$0xff]
        %v1232 = vld [vmem:[%s847 + $0x51] sm:$0xff]
        %v1233 = vld [vmem:[%s847 + $0x61] sm:$0xff]
        %v1234 = vld [vmem:[%s847 + $0x71] sm:$0xff]
        %s1235 = scalar_lea.vmem [#allocation8], 640
        %v1236 = vld [vmem:[%s1235] sm:$0xff]
        %v1237 = vld [vmem:[%s1235 + $0x8] sm:$0xff]
        %v1238 = vld [vmem:[%s1235 + $0x10] sm:$0xff]
        %v1239 = vld [vmem:[%s1235 + $0x18] sm:$0xff]
        %v1240 = vld [vmem:[%s1235 + $0x20] sm:$0xff]
        %v1241 = vld [vmem:[%s1235 + $0x28] sm:$0xff]
        %v1242 = vld [vmem:[%s1235 + $0x30] sm:$0xff]
        %v1243 = vld [vmem:[%s1235 + $0x38] sm:$0xff]
        %v1244 = vld [vmem:[%s1235 + $0x40] sm:$0xff]
        %v1245 = vld [vmem:[%s1235 + $0x48] sm:$0xff]
        %v1246 = vld [vmem:[%s1235 + $0x50] sm:$0xff]
        %v1247 = vld [vmem:[%s1235 + $0x58] sm:$0xff]
        %v1248 = vld [vmem:[%s1235 + $0x60] sm:$0xff]
        %v1249 = vld [vmem:[%s1235 + $0x68] sm:$0xff]
        %v1250 = vld [vmem:[%s1235 + $0x70] sm:$0xff]
        %v1251 = vld [vmem:[%s1235 + $0x78] sm:$0xff]
        %1252 = vmatpush.msra.mxu0 %v1251
        %1253 = vmatpush.msra.mxu0 %v1250
        %1254 = vmatpush.msra.mxu0 %v1249
        %1255 = vmatpush.msra.mxu0 %v1248
        %1256 = vmatpush.msra.mxu0 %v1247
        %1257 = vmatpush.msra.mxu0 %v1246
        %1258 = vmatpush.msra.mxu0 %v1245
        %1259 = vmatpush.msra.mxu0 %v1244
        %1260 = vmatpush.msra.mxu0 %v1243
        %1261 = vmatpush.msra.mxu0 %v1242
        %1262 = vmatpush.msra.mxu0 %v1241
        %1263 = vmatpush.msra.mxu0 %v1240
        %1264 = vmatpush.msra.mxu0 %v1239
        %1265 = vmatpush.msra.mxu0 %v1238
        %1266 = vmatpush.msra.mxu0 %v1237
        %1267 = vmatpush.msra.mxu0 %v1236
        %1268 = vmatmul.f32.gmra.mxu0 %v1227
        %v1269 = vpop.f32.mrf.mxu0
        %v1270 = vadd.f32 0.0, %v1269
        %1271 = vmatmul.f32.gmra.mxu0 %v1228
        %v1272 = vpop.f32.mrf.mxu0
        %v1273 = vadd.f32 0.0, %v1272
        %1274 = vmatmul.f32.gmra.mxu0 %v1229
        %v1275 = vpop.f32.mrf.mxu0
        %v1276 = vadd.f32 0.0, %v1275
        %1277 = vmatmul.f32.gmra.mxu0 %v1230
        %v1278 = vpop.f32.mrf.mxu0
        %v1279 = vadd.f32 0.0, %v1278
        %1280 = vmatmul.f32.gmra.mxu0 %v1231
        %v1281 = vpop.f32.mrf.mxu0
        %v1282 = vadd.f32 0.0, %v1281
        %1283 = vmatmul.f32.gmra.mxu0 %v1232
        %v1284 = vpop.f32.mrf.mxu0
        %v1285 = vadd.f32 0.0, %v1284
        %1286 = vmatmul.f32.gmra.mxu0 %v1233
        %v1287 = vpop.f32.mrf.mxu0
        %v1288 = vadd.f32 0.0, %v1287
        %1289 = vmatmul.f32.gmra.mxu0 %v1234
        %v1290 = vpop.f32.mrf.mxu0
        %v1291 = vadd.f32 0.0, %v1290
        %1292 = vdwg.mxu0
        %v1293 = vadd.f32 %v1219, %v1270
        %v1294 = vadd.f32 %v1220, %v1273
        %v1295 = vadd.f32 %v1221, %v1276
        %v1296 = vadd.f32 %v1222, %v1279
        %v1297 = vadd.f32 %v1223, %v1282
        %v1298 = vadd.f32 %v1224, %v1285
        %v1299 = vadd.f32 %v1225, %v1288
        %v1300 = vadd.f32 %v1226, %v1291
        %v1301 = vld [vmem:[%s865] sm:$0xff]
        %v1302 = vld [vmem:[%s865 + $0x10] sm:$0xff]
        %v1303 = vld [vmem:[%s865 + $0x20] sm:$0xff]
        %v1304 = vld [vmem:[%s865 + $0x30] sm:$0xff]
        %v1305 = vld [vmem:[%s865 + $0x40] sm:$0xff]
        %v1306 = vld [vmem:[%s865 + $0x50] sm:$0xff]
        %v1307 = vld [vmem:[%s865 + $0x60] sm:$0xff]
        %v1308 = vld [vmem:[%s865 + $0x70] sm:$0xff]
        %s1309 = scalar_lea.vmem [#allocation8], 768
        %v1310 = vld [vmem:[%s1309] sm:$0xff]
        %v1311 = vld [vmem:[%s1309 + $0x8] sm:$0xff]
        %v1312 = vld [vmem:[%s1309 + $0x10] sm:$0xff]
        %v1313 = vld [vmem:[%s1309 + $0x18] sm:$0xff]
        %v1314 = vld [vmem:[%s1309 + $0x20] sm:$0xff]
        %v1315 = vld [vmem:[%s1309 + $0x28] sm:$0xff]
        %v1316 = vld [vmem:[%s1309 + $0x30] sm:$0xff]
        %v1317 = vld [vmem:[%s1309 + $0x38] sm:$0xff]
        %v1318 = vld [vmem:[%s1309 + $0x40] sm:$0xff]
        %v1319 = vld [vmem:[%s1309 + $0x48] sm:$0xff]
        %v1320 = vld [vmem:[%s1309 + $0x50] sm:$0xff]
        %v1321 = vld [vmem:[%s1309 + $0x58] sm:$0xff]
        %v1322 = vld [vmem:[%s1309 + $0x60] sm:$0xff]
        %v1323 = vld [vmem:[%s1309 + $0x68] sm:$0xff]
        %v1324 = vld [vmem:[%s1309 + $0x70] sm:$0xff]
        %v1325 = vld [vmem:[%s1309 + $0x78] sm:$0xff]
        %1326 = vmatpush.msra.mxu0 %v1325
        %1327 = vmatpush.msra.mxu0 %v1324
        %1328 = vmatpush.msra.mxu0 %v1323
        %1329 = vmatpush.msra.mxu0 %v1322
        %1330 = vmatpush.msra.mxu0 %v1321
        %1331 = vmatpush.msra.mxu0 %v1320
        %1332 = vmatpush.msra.mxu0 %v1319
        %1333 = vmatpush.msra.mxu0 %v1318
        %1334 = vmatpush.msra.mxu0 %v1317
        %1335 = vmatpush.msra.mxu0 %v1316
        %1336 = vmatpush.msra.mxu0 %v1315
        %1337 = vmatpush.msra.mxu0 %v1314
        %1338 = vmatpush.msra.mxu0 %v1313
        %1339 = vmatpush.msra.mxu0 %v1312
        %1340 = vmatpush.msra.mxu0 %v1311
        %1341 = vmatpush.msra.mxu0 %v1310
        %1342 = vmatmul.f32.gmra.mxu0 %v1301
        %v1343 = vpop.f32.mrf.mxu0
        %v1344 = vadd.f32 0.0, %v1343
        %1345 = vmatmul.f32.gmra.mxu0 %v1302
        %v1346 = vpop.f32.mrf.mxu0
        %v1347 = vadd.f32 0.0, %v1346
        %1348 = vmatmul.f32.gmra.mxu0 %v1303
        %v1349 = vpop.f32.mrf.mxu0
        %v1350 = vadd.f32 0.0, %v1349
        %1351 = vmatmul.f32.gmra.mxu0 %v1304
        %v1352 = vpop.f32.mrf.mxu0
        %v1353 = vadd.f32 0.0, %v1352
        %1354 = vmatmul.f32.gmra.mxu0 %v1305
        %v1355 = vpop.f32.mrf.mxu0
        %v1356 = vadd.f32 0.0, %v1355
        %1357 = vmatmul.f32.gmra.mxu0 %v1306
        %v1358 = vpop.f32.mrf.mxu0
        %v1359 = vadd.f32 0.0, %v1358
        %1360 = vmatmul.f32.gmra.mxu0 %v1307
        %v1361 = vpop.f32.mrf.mxu0
        %v1362 = vadd.f32 0.0, %v1361
        %1363 = vmatmul.f32.gmra.mxu0 %v1308
        %v1364 = vpop.f32.mrf.mxu0
        %v1365 = vadd.f32 0.0, %v1364
        %1366 = vdwg.mxu0
        %v1367 = vadd.f32 %v1293, %v1344
        %v1368 = vadd.f32 %v1294, %v1347
        %v1369 = vadd.f32 %v1295, %v1350
        %v1370 = vadd.f32 %v1296, %v1353
        %v1371 = vadd.f32 %v1297, %v1356
        %v1372 = vadd.f32 %v1298, %v1359
        %v1373 = vadd.f32 %v1299, %v1362
        %v1374 = vadd.f32 %v1300, %v1365
        %v1375 = vld [vmem:[%s856] sm:$0xff]
        %v1376 = vld [vmem:[%s856 + $0x10] sm:$0xff]
        %v1377 = vld [vmem:[%s856 + $0x20] sm:$0xff]
        %v1378 = vld [vmem:[%s856 + $0x30] sm:$0xff]
        %v1379 = vld [vmem:[%s856 + $0x40] sm:$0xff]
        %v1380 = vld [vmem:[%s856 + $0x50] sm:$0xff]
        %v1381 = vld [vmem:[%s856 + $0x60] sm:$0xff]
        %v1382 = vld [vmem:[%s856 + $0x70] sm:$0xff]
        %s1383 = scalar_lea.vmem [#allocation8], 896
        %v1384 = vld [vmem:[%s1383] sm:$0xff]
        %v1385 = vld [vmem:[%s1383 + $0x8] sm:$0xff]
        %v1386 = vld [vmem:[%s1383 + $0x10] sm:$0xff]
        %v1387 = vld [vmem:[%s1383 + $0x18] sm:$0xff]
        %v1388 = vld [vmem:[%s1383 + $0x20] sm:$0xff]
        %v1389 = vld [vmem:[%s1383 + $0x28] sm:$0xff]
        %v1390 = vld [vmem:[%s1383 + $0x30] sm:$0xff]
        %v1391 = vld [vmem:[%s1383 + $0x38] sm:$0xff]
        %v1392 = vld [vmem:[%s1383 + $0x40] sm:$0xff]
        %v1393 = vld [vmem:[%s1383 + $0x48] sm:$0xff]
        %v1394 = vld [vmem:[%s1383 + $0x50] sm:$0xff]
        %v1395 = vld [vmem:[%s1383 + $0x58] sm:$0xff]
        %v1396 = vld [vmem:[%s1383 + $0x60] sm:$0xff]
        %v1397 = vld [vmem:[%s1383 + $0x68] sm:$0xff]
        %v1398 = vld [vmem:[%s1383 + $0x70] sm:$0xff]
        %v1399 = vld [vmem:[%s1383 + $0x78] sm:$0xff]
        %1400 = vmatpush.msra.mxu0 %v1399
        %1401 = vmatpush.msra.mxu0 %v1398
        %1402 = vmatpush.msra.mxu0 %v1397
        %1403 = vmatpush.msra.mxu0 %v1396
        %1404 = vmatpush.msra.mxu0 %v1395
        %1405 = vmatpush.msra.mxu0 %v1394
        %1406 = vmatpush.msra.mxu0 %v1393
        %1407 = vmatpush.msra.mxu0 %v1392
        %1408 = vmatpush.msra.mxu0 %v1391
        %1409 = vmatpush.msra.mxu0 %v1390
        %1410 = vmatpush.msra.mxu0 %v1389
        %1411 = vmatpush.msra.mxu0 %v1388
        %1412 = vmatpush.msra.mxu0 %v1387
        %1413 = vmatpush.msra.mxu0 %v1386
        %1414 = vmatpush.msra.mxu0 %v1385
        %1415 = vmatpush.msra.mxu0 %v1384
        %1416 = vmatmul.f32.gmra.mxu0 %v1375
        %v1417 = vpop.f32.mrf.mxu0
        %v1418 = vadd.f32 0.0, %v1417
        %1419 = vmatmul.f32.gmra.mxu0 %v1376
        %v1420 = vpop.f32.mrf.mxu0
        %v1421 = vadd.f32 0.0, %v1420
        %1422 = vmatmul.f32.gmra.mxu0 %v1377
        %v1423 = vpop.f32.mrf.mxu0
        %v1424 = vadd.f32 0.0, %v1423
        %1425 = vmatmul.f32.gmra.mxu0 %v1378
        %v1426 = vpop.f32.mrf.mxu0
        %v1427 = vadd.f32 0.0, %v1426
        %1428 = vmatmul.f32.gmra.mxu0 %v1379
        %v1429 = vpop.f32.mrf.mxu0
        %v1430 = vadd.f32 0.0, %v1429
        %1431 = vmatmul.f32.gmra.mxu0 %v1380
        %v1432 = vpop.f32.mrf.mxu0
        %v1433 = vadd.f32 0.0, %v1432
        %1434 = vmatmul.f32.gmra.mxu0 %v1381
        %v1435 = vpop.f32.mrf.mxu0
        %v1436 = vadd.f32 0.0, %v1435
        %1437 = vmatmul.f32.gmra.mxu0 %v1382
        %v1438 = vpop.f32.mrf.mxu0
        %v1439 = vadd.f32 0.0, %v1438
        %1440 = vdwg.mxu0
        %v1441 = vadd.f32 %v1367, %v1418
        %v1442 = vadd.f32 %v1368, %v1421
        %v1443 = vadd.f32 %v1369, %v1424
        %v1444 = vadd.f32 %v1370, %v1427
        %v1445 = vadd.f32 %v1371, %v1430
        %v1446 = vadd.f32 %v1372, %v1433
        %v1447 = vadd.f32 %v1373, %v1436
        %v1448 = vadd.f32 %v1374, %v1439
        %v1449 = vld [vmem:[%s865 + $0x1] sm:$0xff]
        %v1450 = vld [vmem:[%s865 + $0x11] sm:$0xff]
        %v1451 = vld [vmem:[%s865 + $0x21] sm:$0xff]
        %v1452 = vld [vmem:[%s865 + $0x31] sm:$0xff]
        %v1453 = vld [vmem:[%s865 + $0x41] sm:$0xff]
        %v1454 = vld [vmem:[%s865 + $0x51] sm:$0xff]
        %v1455 = vld [vmem:[%s865 + $0x61] sm:$0xff]
        %v1456 = vld [vmem:[%s865 + $0x71] sm:$0xff]
        %s1457 = scalar_lea.vmem [#allocation8], 1024
        %v1458 = vld [vmem:[%s1457] sm:$0xff]
        %v1459 = vld [vmem:[%s1457 + $0x8] sm:$0xff]
        %v1460 = vld [vmem:[%s1457 + $0x10] sm:$0xff]
        %v1461 = vld [vmem:[%s1457 + $0x18] sm:$0xff]
        %v1462 = vld [vmem:[%s1457 + $0x20] sm:$0xff]
        %v1463 = vld [vmem:[%s1457 + $0x28] sm:$0xff]
        %v1464 = vld [vmem:[%s1457 + $0x30] sm:$0xff]
        %v1465 = vld [vmem:[%s1457 + $0x38] sm:$0xff]
        %v1466 = vld [vmem:[%s1457 + $0x40] sm:$0xff]
        %v1467 = vld [vmem:[%s1457 + $0x48] sm:$0xff]
        %v1468 = vld [vmem:[%s1457 + $0x50] sm:$0xff]
        %v1469 = vld [vmem:[%s1457 + $0x58] sm:$0xff]
        %v1470 = vld [vmem:[%s1457 + $0x60] sm:$0xff]
        %v1471 = vld [vmem:[%s1457 + $0x68] sm:$0xff]
        %v1472 = vld [vmem:[%s1457 + $0x70] sm:$0xff]
        %v1473 = vld [vmem:[%s1457 + $0x78] sm:$0xff]
        %1474 = vmatpush.msra.mxu0 %v1473
        %1475 = vmatpush.msra.mxu0 %v1472
        %1476 = vmatpush.msra.mxu0 %v1471
        %1477 = vmatpush.msra.mxu0 %v1470
        %1478 = vmatpush.msra.mxu0 %v1469
        %1479 = vmatpush.msra.mxu0 %v1468
        %1480 = vmatpush.msra.mxu0 %v1467
        %1481 = vmatpush.msra.mxu0 %v1466
        %1482 = vmatpush.msra.mxu0 %v1465
        %1483 = vmatpush.msra.mxu0 %v1464
        %1484 = vmatpush.msra.mxu0 %v1463
        %1485 = vmatpush.msra.mxu0 %v1462
        %1486 = vmatpush.msra.mxu0 %v1461
        %1487 = vmatpush.msra.mxu0 %v1460
        %1488 = vmatpush.msra.mxu0 %v1459
        %1489 = vmatpush.msra.mxu0 %v1458
        %1490 = vmatmul.f32.gmra.mxu0 %v1449
        %v1491 = vpop.f32.mrf.mxu0
        %v1492 = vadd.f32 0.0, %v1491
        %1493 = vmatmul.f32.gmra.mxu0 %v1450
        %v1494 = vpop.f32.mrf.mxu0
        %v1495 = vadd.f32 0.0, %v1494
        %1496 = vmatmul.f32.gmra.mxu0 %v1451
        %v1497 = vpop.f32.mrf.mxu0
        %v1498 = vadd.f32 0.0, %v1497
        %1499 = vmatmul.f32.gmra.mxu0 %v1452
        %v1500 = vpop.f32.mrf.mxu0
        %v1501 = vadd.f32 0.0, %v1500
        %1502 = vmatmul.f32.gmra.mxu0 %v1453
        %v1503 = vpop.f32.mrf.mxu0
        %v1504 = vadd.f32 0.0, %v1503
        %1505 = vmatmul.f32.gmra.mxu0 %v1454
        %v1506 = vpop.f32.mrf.mxu0
        %v1507 = vadd.f32 0.0, %v1506
        %1508 = vmatmul.f32.gmra.mxu0 %v1455
        %v1509 = vpop.f32.mrf.mxu0
        %v1510 = vadd.f32 0.0, %v1509
        %1511 = vmatmul.f32.gmra.mxu0 %v1456
        %v1512 = vpop.f32.mrf.mxu0
        %v1513 = vadd.f32 0.0, %v1512
        %1514 = vdwg.mxu0
        %v1515 = vadd.f32 %v1441, %v1492
        %v1516 = vadd.f32 %v1442, %v1495
        %v1517 = vadd.f32 %v1443, %v1498
        %v1518 = vadd.f32 %v1444, %v1501
        %v1519 = vadd.f32 %v1445, %v1504
        %v1520 = vadd.f32 %v1446, %v1507
        %v1521 = vadd.f32 %v1447, %v1510
        %v1522 = vadd.f32 %v1448, %v1513
        %v1523 = vld [vmem:[%s5] sm:$0x1]
        %v1525 = vperm.slane %v1523, 0
        %v1527 = vmul.f32 %v1515, %v1525
        %v1528 = vmul.f32 %v1516, %v1525
        %v1529 = vmul.f32 %v1517, %v1525
        %v1530 = vmul.f32 %v1518, %v1525
        %v1531 = vmul.f32 %v1519, %v1525
        %v1532 = vmul.f32 %v1520, %v1525
        %v1533 = vmul.f32 %v1521, %v1525
        %v1534 = vmul.f32 %v1522, %v1525
        %v1535 = vld [vmem:[%s6] sm:$0x1]
        %v1537 = vperm.slane %v1535, 0
        %v1539 = vadd.f32 %v1527, %v1537
        %v1540 = vadd.f32 %v1528, %v1537
        %v1541 = vadd.f32 %v1529, %v1537
        %v1542 = vadd.f32 %v1530, %v1537
        %v1543 = vadd.f32 %v1531, %v1537
        %v1544 = vadd.f32 %v1532, %v1537
        %v1545 = vadd.f32 %v1533, %v1537
        %v1546 = vadd.f32 %v1534, %v1537
        %v1547 = vmax.f32 %v1539, 0.0
        %v1548 = vmax.f32 %v1540, 0.0
        %v1549 = vmax.f32 %v1541, 0.0
        %v1550 = vmax.f32 %v1542, 0.0
        %v1551 = vmax.f32 %v1543, 0.0
        %v1552 = vmax.f32 %v1544, 0.0
        %v1553 = vmax.f32 %v1545, 0.0
        %v1554 = vmax.f32 %v1546, 0.0
        %v1555 = vld [vmem:[#allocation9] sm:$0xff]
        %v1556 = vld [vmem:[#allocation9 + $0x8] sm:$0xff]
        %v1557 = vld [vmem:[#allocation9 + $0x10] sm:$0xff]
        %v1558 = vld [vmem:[#allocation9 + $0x18] sm:$0xff]
        %v1559 = vld [vmem:[#allocation9 + $0x20] sm:$0xff]
        %v1560 = vld [vmem:[#allocation9 + $0x28] sm:$0xff]
        %v1561 = vld [vmem:[#allocation9 + $0x30] sm:$0xff]
        %v1562 = vld [vmem:[#allocation9 + $0x38] sm:$0xff]
        %v1563 = vld [vmem:[#allocation9 + $0x40] sm:$0xff]
        %v1564 = vld [vmem:[#allocation9 + $0x48] sm:$0xff]
        %v1565 = vld [vmem:[#allocation9 + $0x50] sm:$0xff]
        %v1566 = vld [vmem:[#allocation9 + $0x58] sm:$0xff]
        %v1567 = vld [vmem:[#allocation9 + $0x60] sm:$0xff]
        %v1568 = vld [vmem:[#allocation9 + $0x68] sm:$0xff]
        %v1569 = vld [vmem:[#allocation9 + $0x70] sm:$0xff]
        %v1570 = vld [vmem:[#allocation9 + $0x78] sm:$0xff]
        %1571 = vmatpush.msra.mxu0 %v1570
        %1572 = vmatpush.msra.mxu0 %v1569
        %1573 = vmatpush.msra.mxu0 %v1568
        %1574 = vmatpush.msra.mxu0 %v1567
        %1575 = vmatpush.msra.mxu0 %v1566
        %1576 = vmatpush.msra.mxu0 %v1565
        %1577 = vmatpush.msra.mxu0 %v1564
        %1578 = vmatpush.msra.mxu0 %v1563
        %1579 = vmatpush.msra.mxu0 %v1562
        %1580 = vmatpush.msra.mxu0 %v1561
        %1581 = vmatpush.msra.mxu0 %v1560
        %1582 = vmatpush.msra.mxu0 %v1559
        %1583 = vmatpush.msra.mxu0 %v1558
        %1584 = vmatpush.msra.mxu0 %v1557
        %1585 = vmatpush.msra.mxu0 %v1556
        %1586 = vmatpush.msra.mxu0 %v1555
        %1587 = vmatmul.f32.gmra.mxu0 %v1547
        %v1588 = vpop.f32.mrf.mxu0
        %v1589 = vadd.f32 0.0, %v1588
        %1590 = vmatmul.f32.gmra.mxu0 %v1548
        %v1591 = vpop.f32.mrf.mxu0
        %v1592 = vadd.f32 0.0, %v1591
        %1593 = vmatmul.f32.gmra.mxu0 %v1549
        %v1594 = vpop.f32.mrf.mxu0
        %v1595 = vadd.f32 0.0, %v1594
        %1596 = vmatmul.f32.gmra.mxu0 %v1550
        %v1597 = vpop.f32.mrf.mxu0
        %v1598 = vadd.f32 0.0, %v1597
        %1599 = vmatmul.f32.gmra.mxu0 %v1551
        %v1600 = vpop.f32.mrf.mxu0
        %v1601 = vadd.f32 0.0, %v1600
        %1602 = vmatmul.f32.gmra.mxu0 %v1552
        %v1603 = vpop.f32.mrf.mxu0
        %v1604 = vadd.f32 0.0, %v1603
        %1605 = vmatmul.f32.gmra.mxu0 %v1553
        %v1606 = vpop.f32.mrf.mxu0
        %v1607 = vadd.f32 0.0, %v1606
        %1608 = vmatmul.f32.gmra.mxu0 %v1554
        %v1609 = vpop.f32.mrf.mxu0
        %v1610 = vadd.f32 0.0, %v1609
        %1611 = vdwg.mxu0
        %v1612 = vld [vmem:[%s8] sm:$0x1]
        %v1614 = vperm.slane %v1612, 0
        %v1616 = vmul.f32 %v1589, %v1614
        %v1617 = vmul.f32 %v1592, %v1614
        %v1618 = vmul.f32 %v1595, %v1614
        %v1619 = vmul.f32 %v1598, %v1614
        %v1620 = vmul.f32 %v1601, %v1614
        %v1621 = vmul.f32 %v1604, %v1614
        %v1622 = vmul.f32 %v1607, %v1614
        %v1623 = vmul.f32 %v1610, %v1614
        %v1624 = vld [vmem:[%s9] sm:$0x1]
        %v1626 = vperm.slane %v1624, 0
        %v1628 = vadd.f32 %v1616, %v1626
        %v1629 = vadd.f32 %v1617, %v1626
        %v1630 = vadd.f32 %v1618, %v1626
        %v1631 = vadd.f32 %v1619, %v1626
        %v1632 = vadd.f32 %v1620, %v1626
        %v1633 = vadd.f32 %v1621, %v1626
        %v1634 = vadd.f32 %v1622, %v1626
        %v1635 = vadd.f32 %v1623, %v1626
        %v1636 = vld [vmem:[#allocation11] sm:$0xff]
        %v1637 = vld [vmem:[#allocation11 + $0x8] sm:$0xff]
        %v1638 = vld [vmem:[#allocation11 + $0x10] sm:$0xff]
        %v1639 = vld [vmem:[#allocation11 + $0x18] sm:$0xff]
        %v1640 = vld [vmem:[#allocation11 + $0x20] sm:$0xff]
        %v1641 = vld [vmem:[#allocation11 + $0x28] sm:$0xff]
        %v1642 = vld [vmem:[#allocation11 + $0x30] sm:$0xff]
        %v1643 = vld [vmem:[#allocation11 + $0x38] sm:$0xff]
        %v1644 = vld [vmem:[#allocation11 + $0x40] sm:$0xff]
        %v1645 = vld [vmem:[#allocation11 + $0x48] sm:$0xff]
        %v1646 = vld [vmem:[#allocation11 + $0x50] sm:$0xff]
        %v1647 = vld [vmem:[#allocation11 + $0x58] sm:$0xff]
        %v1648 = vld [vmem:[#allocation11 + $0x60] sm:$0xff]
        %v1649 = vld [vmem:[#allocation11 + $0x68] sm:$0xff]
        %v1650 = vld [vmem:[#allocation11 + $0x70] sm:$0xff]
        %v1651 = vld [vmem:[#allocation11 + $0x78] sm:$0xff]
        %1652 = vmatpush.msra.mxu0 %v1651
        %1653 = vmatpush.msra.mxu0 %v1650
        %1654 = vmatpush.msra.mxu0 %v1649
        %1655 = vmatpush.msra.mxu0 %v1648
        %1656 = vmatpush.msra.mxu0 %v1647
        %1657 = vmatpush.msra.mxu0 %v1646
        %1658 = vmatpush.msra.mxu0 %v1645
        %1659 = vmatpush.msra.mxu0 %v1644
        %1660 = vmatpush.msra.mxu0 %v1643
        %1661 = vmatpush.msra.mxu0 %v1642
        %1662 = vmatpush.msra.mxu0 %v1641
        %1663 = vmatpush.msra.mxu0 %v1640
        %1664 = vmatpush.msra.mxu0 %v1639
        %1665 = vmatpush.msra.mxu0 %v1638
        %1666 = vmatpush.msra.mxu0 %v1637
        %1667 = vmatpush.msra.mxu0 %v1636
        %1668 = vmatmul.f32.gmra.mxu0 %v527
        %v1669 = vpop.f32.mrf.mxu0
        %v1670 = vadd.f32 0.0, %v1669
        %1671 = vmatmul.f32.gmra.mxu0 %v528
        %v1672 = vpop.f32.mrf.mxu0
        %v1673 = vadd.f32 0.0, %v1672
        %1674 = vmatmul.f32.gmra.mxu0 %v529
        %v1675 = vpop.f32.mrf.mxu0
        %v1676 = vadd.f32 0.0, %v1675
        %1677 = vmatmul.f32.gmra.mxu0 %v530
        %v1678 = vpop.f32.mrf.mxu0
        %v1679 = vadd.f32 0.0, %v1678
        %1680 = vmatmul.f32.gmra.mxu0 %v531
        %v1681 = vpop.f32.mrf.mxu0
        %v1682 = vadd.f32 0.0, %v1681
        %1683 = vmatmul.f32.gmra.mxu0 %v532
        %v1684 = vpop.f32.mrf.mxu0
        %v1685 = vadd.f32 0.0, %v1684
        %1686 = vmatmul.f32.gmra.mxu0 %v533
        %v1687 = vpop.f32.mrf.mxu0
        %v1688 = vadd.f32 0.0, %v1687
        %1689 = vmatmul.f32.gmra.mxu0 %v534
        %v1690 = vpop.f32.mrf.mxu0
        %v1691 = vadd.f32 0.0, %v1690
        %1692 = vdwg.mxu0
        %v1693 = vld [vmem:[%s11] sm:$0x1]
        %v1695 = vperm.slane %v1693, 0
        %v1697 = vmul.f32 %v1670, %v1695
        %v1698 = vmul.f32 %v1673, %v1695
        %v1699 = vmul.f32 %v1676, %v1695
        %v1700 = vmul.f32 %v1679, %v1695
        %v1701 = vmul.f32 %v1682, %v1695
        %v1702 = vmul.f32 %v1685, %v1695
        %v1703 = vmul.f32 %v1688, %v1695
        %v1704 = vmul.f32 %v1691, %v1695
        %v1705 = vld [vmem:[%s12] sm:$0x1]
        %v1707 = vperm.slane %v1705, 0
        %v1709 = vadd.f32 %v1697, %v1707
        %v1710 = vadd.f32 %v1698, %v1707
        %v1711 = vadd.f32 %v1699, %v1707
        %v1712 = vadd.f32 %v1700, %v1707
        %v1713 = vadd.f32 %v1701, %v1707
        %v1714 = vadd.f32 %v1702, %v1707
        %v1715 = vadd.f32 %v1703, %v1707
        %v1716 = vadd.f32 %v1704, %v1707
        %v1717 = vadd.f32 %v1628, %v1709
        %v1718 = vadd.f32 %v1629, %v1710
        %v1719 = vadd.f32 %v1630, %v1711
        %v1720 = vadd.f32 %v1631, %v1712
        %v1721 = vadd.f32 %v1632, %v1713
        %v1722 = vadd.f32 %v1633, %v1714
        %v1723 = vadd.f32 %v1634, %v1715
        %v1724 = vadd.f32 %v1635, %v1716
        %v1725 = vmax.f32 %v1717, 0.0
        %v1726 = vmax.f32 %v1718, 0.0
        %v1727 = vmax.f32 %v1719, 0.0
        %v1728 = vmax.f32 %v1720, 0.0
        %v1729 = vmax.f32 %v1721, 0.0
        %v1730 = vmax.f32 %v1722, 0.0
        %v1731 = vmax.f32 %v1723, 0.0
        %v1732 = vmax.f32 %v1724, 0.0
        %1733 = vst [vmem:[%s526] sm:$0xff] %v1725
        %1734 = vst [vmem:[%s526 + $0x8] sm:$0xff] %v1726
        %1735 = vst [vmem:[%s526 + $0x10] sm:$0xff] %v1727
        %1736 = vst [vmem:[%s526 + $0x18] sm:$0xff] %v1728
        %1737 = vst [vmem:[%s526 + $0x20] sm:$0xff] %v1729
        %1738 = vst [vmem:[%s526 + $0x28] sm:$0xff] %v1730
        %1739 = vst [vmem:[%s526 + $0x30] sm:$0xff] %v1731
        %1740 = vst [vmem:[%s526 + $0x38] sm:$0xff] %v1732
        %s1741 = sand.u32 %s318, 1
        %s1742 = scalar_lea.sflag [#allocation5], %s1741
        %s1743 = sand.u32 %s318, 1
        %s1744 = smul.addr %s1743, 64
        %s1745 = scalar_lea.vmem [#allocation12], %s1744
        // Predicated region
        $region93: #{tpu_custom_call.1} parent=71 // pred_check
          %p1746 = pneg %p328
        $region94: #{tpu_custom_call.1} parent=71 // pred_check_branch
          %1748 = sbr.rel (%p1746) target = $region96
        $region95: #{tpu_custom_call.1} parent=71 // pred_region
          %1750 = vsyncadd %s1742, 0
          %s1751 = smul.addr %s32, 8
          %s1752 = smul.addr %s1751, 8
          %s1753 = scalar_lea.hbm %s13, %s1752
          %s1754 = sshll.u32 %s1745, 4
          %s1755 = int_to_ptr.vmem [resolvable:$true] %s1754
          %s1756 = sshll.u32 %s1753, 4
          %s1757 = int_to_ptr.hbm [resolvable:$true] %s1756
          %1762 = dma.vmem_to_hbm [thread:$0]  %s1755, 1024, %s1757, %s1742, 128, 128, 8
        $region96: #{tpu_custom_call.1} parent=71 // pred_fallthru
          _
      $region72: #{tpu_custom_call.1} parent=5 // pred_fallthru
        _
      %p1763 = scmp.le.s32.totalorder 2, %s27
      // Predicated region
      $region97: #{tpu_custom_call.1} parent=5 // pred_check
        %p1764 = pneg %p1763
      $region98: #{tpu_custom_call.1} parent=5 // pred_check_branch
        %1766 = sbr.rel (%p1764) target = $region100
      $region99: #{tpu_custom_call.1} parent=5 // pred_region
        %s1767 = ssub.s32 %s27, 2
        // Predicated region
        $region101: #{tpu_custom_call.1} parent=99 // pred_check
          %p1768 = pneg %p334
        $region102: #{tpu_custom_call.1} parent=99 // pred_check_branch
          %1770 = sbr.rel (%p1768) target = $region104
        $region103: #{tpu_custom_call.1} parent=99 // pred_region
          %s1771 = sand.u32 %s319, 1
          %s1772 = scalar_lea.sflag [#allocation5], %s1771
          %s1773 = sand.u32 %s319, 1
          %s1774 = smul.addr %s1773, 64
          %s1775 = scalar_lea.vmem [#allocation12], %s1774
          %1777 = dma.done %s1772, 1024
        $region104: #{tpu_custom_call.1} parent=99 // pred_fallthru
          _
      $region100: #{tpu_custom_call.1} parent=5 // pred_fallthru
        _
    $region6: #{tpu_custom_call.1} parent=1 // loop_footer
      %s31 = sadd.s32 1, %s27
    $region7: #{tpu_custom_call.1} parent=1 // loop_footer_branch
      %26 = sbr.rel target = $region3
    $region8: #{tpu_custom_call.1} parent=1 // loop_exit
      _
    %1778 = vsyncpa [#allocation4], 1
    %s1779 = scalar_lea.sflag [#allocation4], 1
    %1780 = vsyncpa %s1779, 1
    %1781 = vsyncpa [#allocation7], 1
    %1782 = vsyncpa [#allocation10], 1
    %1783 = vsyncpa [#allocation5], 1
    %s1784 = scalar_lea.sflag [#allocation5], 1
    %1785 = vsyncpa %s1784, 1

</llo_original>
